<compile_context>
chip_gen: v7x
topology: tpu7x:2x2x1
jax: 0.10.0
libtpu: 0.0.40
codegen_flags: <defaults>
</compile_context>

<pallas_src>
import functools
import itertools
import math

import jax
import jax.numpy as jnp
from jax.experimental import pallas as pl
from jax.experimental.pallas import tpu as pltpu


# ---------------------------------------------------------------------------
# Host-side helpers.
# ---------------------------------------------------------------------------
def _tap_mask(H, W):
    """(9, S) f32: 1.0 where output pixel p keeps a valid (row AND column) source for
    tap t after the circular lane roll; 0.0 reproduces the conv's zero padding."""
    S = H * W
    p = jnp.arange(S, dtype=jnp.int32)
    i, j = p // W, p % W
    rows = []
    for t in range(9):
        dy, dx = t // 3 - 1, t % 3 - 1
        ok = (i + dy >= 0) & (i + dy < H) & (j + dx >= 0) & (j + dx < W)
        rows.append(ok.astype(jnp.float32))
    return jnp.stack(rows, axis=0)


def _flatten_nchw(x):
    N, C, H, W = x.shape
    return x.reshape(N, C, H * W)          # free row-major view


# ---------------------------------------------------------------------------
# The single fused tree kernel.
# `ops` is a static, host-built program: a sequence of conv blocks and aggregations.
# ---------------------------------------------------------------------------
def _tree_kernel(mask_ref, *refs, ops, n_ext, n_params, final, W, nb):
    ext_refs = refs[:n_ext]
    param_refs = refs[n_ext:n_ext + n_params]
    o_ref = refs[n_ext + n_params]
    S = mask_ref.shape[-1]

    # (1, S) validity rows, loaded once per grid step (tap 4 == center == all ones).
    masks = [None if t == 4 else mask_ref[pl.ds(t, 1), :] for t in range(9)]

    def conv3x3_relu(act, w_ref, b_ref):
        # act: (C_in, S) f32.  9 taps via XLU roll + VPU mask, then ONE MXU dot
        # (C_out, 9*C_in) @ (9*C_in, S) with bf16 inputs / f32 accumulation.
        taps = []
        for t in range(9):
            dy, dx = t // 3 - 1, t % 3 - 1
            d = dy * W + dx
            if d == 0:
                taps.append(act)
            else:
                rolled = pltpu.roll(act, shift=(-d) % S, axis=1)
                taps.append(rolled * masks[t])
        stacked = jnp.concatenate(taps, axis=0).astype(w_ref.dtype)
        y = jnp.dot(w_ref[...], stacked, preferred_element_type=jnp.float32)
        return jnp.maximum(y + b_ref[...], 0.0)

    def aggregate(srcs, w_ref, b_ref):
        # Concat never touches HBM: sources are VMEM-resident values; one K=c_agg dot.
        cat = jnp.concatenate(srcs, axis=0).astype(w_ref.dtype)
        y = jnp.dot(w_ref[...], cat, preferred_element_type=jnp.float32)
        return y + b_ref[...]

    for i in range(nb):                      # static unroll over images in this step
        env = {("ext", k): ext_refs[k][i].astype(jnp.float32) for k in range(n_ext)}
        for kind, src, wi, bi, dst in ops:
            if kind == "block":
                env[dst] = conv3x3_relu(env[src], param_refs[wi], param_refs[bi])
            else:  # "agg"
                env[dst] = aggregate([env[s] for s in src],
                                     param_refs[wi], param_refs[bi])
        o_ref[i] = env[final].astype(o_ref.dtype)


# ---------------------------------------------------------------------------
# Host wrapper: flatten the tree into a static op list, prep weights, launch once.
# ---------------------------------------------------------------------------
def fused_tree_apply(node, x, pass_through=None, *, mxu_dtype=jnp.bfloat16,
                     images_per_step=1):
    N, _, H, W = x.shape
    S = H * W
    ext = [x] + list(pass_through or [])
    for e in ext:
        assert e.shape[0] == N and e.shape[2:] == (H, W), e.shape

    params, ops = [], []
    counter = itertools.count()

    def add(arr):
        params.append(arr)
        return len(params) - 1

    def prep_block(p):
        w, b = p["w"], p["b"]                               # (3,3,ci,co), (co,)
        _, _, ci, co = w.shape
        # (co, 9*ci) so that one dot against the stacked taps computes the 3x3 conv.
        wm = w.reshape(9, ci, co).transpose(2, 0, 1).reshape(co, 9 * ci)
        return add(wm.astype(mxu_dtype)), add(b.reshape(co, 1).astype(jnp.float32))

    def prep_agg(p):
        w, b = p["w"], p["b"]                               # (c_agg, co), (co,)
        return (add(jnp.transpose(w).astype(mxu_dtype)),
                add(b.reshape(-1, 1).astype(jnp.float32)))

    def flatten(nd, src, pts):
        if nd.level <= 0:
            wi, bi = prep_block(nd.left)
            dst = ("v", next(counter))
            ops.append(("block", src, wi, bi, dst))
            return dst
        if nd.aggregator is not None:                        # level == 1
            wi, bi = prep_block(nd.left)
            y1 = ("v", next(counter))
            ops.append(("block", src, wi, bi, y1))
            wj, bj = prep_block(nd.right)
            y2 = ("v", next(counter))
            ops.append(("block", y1, wj, bj, y2))
            wa, ba = prep_agg(nd.aggregator)
            out = ("v", next(counter))
            ops.append(("agg", tuple(pts + [y1, y2]), wa, ba, out))
            return out
        y1 = flatten(nd.left, src, [])
        return flatten(nd.right, y1, pts + [y1])

    final = flatten(node, ("ext", 0), [("ext", k) for k in range(1, len(ext))])
    c_out = int(params[ops[-1][3]].shape[0])                 # last op's bias rows

    nb = images_per_step                     # v7x: keep >= 2 parallel steps (nb=1, N>=2)
    assert N % nb == 0, (N, nb)              # v5e/v6e: nb=N collapses to one grid step

    mask = _tap_mask(H, W)
    ext_flat = [_flatten_nchw(e) for e in ext]

    in_specs = [pl.BlockSpec((9, S), lambda n: (0, 0))]
    for e in ext_flat:
        in_specs.append(pl.BlockSpec((nb, e.shape[1], S), lambda n: (n, 0, 0)))
    in_specs += [pl.BlockSpec(p.shape, lambda n: (0, 0)) for p in params]  # all 2-D

    kernel = functools.partial(
        _tree_kernel, ops=tuple(ops), n_ext=len(ext), n_params=len(params),
        final=final, W=W, nb=nb)

    out = pl.pallas_call(
        kernel,
        out_shape=jax.ShapeDtypeStruct((N, c_out, S), x.dtype),
        grid=(N // nb,),
        in_specs=in_specs,
        out_specs=pl.BlockSpec((nb, c_out, S), lambda n: (n, 0, 0)),
        compiler_params=pltpu.CompilerParams(dimension_semantics=("parallel",)),
    )(mask, *ext_flat, *params)
    return out.reshape(N, c_out, H, W)


# ---------------------------------------------------------------------------
# Pure-JAX references (same parameters, unfused, f32 HIGHEST precision).
# ---------------------------------------------------------------------------
def _conv3x3_relu_ref(x, w_hwio, b):
    y = jax.lax.conv_general_dilated(
        x, w_hwio, window_strides=(1, 1), padding="SAME",
        dimension_numbers=("NCHW", "HWIO", "NCHW"),
        precision=jax.lax.Precision.HIGHEST)
    return jnp.maximum(y + b.reshape(1, -1, 1, 1), 0.0)


def _aggregate_ref(x, w, b):
    return (jnp.einsum("nchw,cf->nfhw", x, w, precision=jax.lax.Precision.HIGHEST)
            + b.reshape(1, -1, 1, 1))


# ---------------------------------------------------------------------------
# AggregationTreeNode, mirroring the PyTorch module's __init__ / forward exactly.
# ---------------------------------------------------------------------------
class AggregationTreeNode:
    def __init__(self, channels_in, channels_out, level, block_factory,
                 aggregator_factory, channels_agg=0, downsample=1,
                 block_args=None, block_kwargs=None):
        if block_args is None:
            block_args = []
        if block_kwargs is None:
            block_kwargs = {}
        if channels_agg == 0:
            channels_agg = 2 * channels_out
        self.aggregator = None
        self.level = level
        if level <= 0:
            self.left = block_factory(channels_in, channels_out, *block_args,
                                      downsample=downsample, **block_kwargs)
            self.right = None
        elif level == 1:
            self.aggregator = aggregator_factory(channels_agg, channels_out)
            self.left = block_factory(channels_in, channels_out, *block_args,
                                      downsample=downsample, **block_kwargs)
            self.right = block_factory(channels_out, channels_out, *block_args,
                                       downsample=1, **block_kwargs)
        else:
            self.left = AggregationTreeNode(
                channels_in, channels_out, level - 1, block_factory,
                aggregator_factory, downsample=downsample,
                block_args=block_args, block_kwargs=block_kwargs)
            self.right = AggregationTreeNode(
                channels_out, channels_out, level - 1, block_factory,
                aggregator_factory, channels_agg=channels_agg + channels_out,
                downsample=1, block_args=block_args, block_kwargs=block_kwargs)

    # ---- Pallas forward: the whole tree in one pallas_call ----
    def __call__(self, x, pass_through=None, *, mxu_dtype=jnp.bfloat16,
                 images_per_step=1):
        return fused_tree_apply(self, x, pass_through, mxu_dtype=mxu_dtype,
                                images_per_step=images_per_step)

    # ---- pure-JAX reference forward (mirrors the PyTorch forward) ----
    def reference(self, x, pass_through=None):
        if self.level <= 0:
            return _conv3x3_relu_ref(x, self.left["w"], self.left["b"])
        if pass_through is None:
            pass_through = []
        if self.aggregator is not None:
            y_1 = _conv3x3_relu_ref(x, self.left["w"], self.left["b"])
            y_2 = _conv3x3_relu_ref(y_1, self.right["w"], self.right["b"])
            cat = jnp.concatenate(pass_through + [y_1, y_2], axis=1)
            return _aggregate_ref(cat, self.aggregator["w"], self.aggregator["b"])
        y_1 = self.left.reference(x)
        return self.right.reference(y_1, pass_through + [y_1])


def build_tree(channels_in, channels_out, level, seed=0):
    """Deterministic synthetic params (same seed -> same params)."""
    keys = list(jax.random.split(jax.random.PRNGKey(seed), 64))
    counter = [0]

    def next_key():
        k = keys[counter[0]]
        counter[0] += 1
        return k

    def block_factory(ci, co, downsample=1):
        if downsample != 1:
            # TODO(synk): strided 3x3 conv (downsample > 1) not implemented in the kernel.
            raise NotImplementedError("downsample != 1 not supported")
        kw, kb = jax.random.split(next_key())
        return {"w": jax.random.normal(kw, (3, 3, ci, co), jnp.float32) / math.sqrt(9 * ci),
                "b": 0.01 * jax.random.normal(kb, (co,), jnp.float32)}

    def aggregator_factory(c_agg, co):
        kw, kb = jax.random.split(next_key())
        return {"w": jax.random.normal(kw, (c_agg, co), jnp.float32) / math.sqrt(c_agg),
                "b": 0.01 * jax.random.normal(kb, (co,), jnp.float32)}

    return AggregationTreeNode(channels_in, channels_out, level,
                               block_factory, aggregator_factory)


if __name__ == "__main__":
    N, C_IN, C_OUT, H, W = 2, 8, 16, 16, 16
    LEVEL = 2   # exercises recursion + pass_through aggregation

    x = jax.random.normal(jax.random.PRNGKey(0), (N, C_IN, H, W), jnp.float32)  # NCHW

    tree = build_tree(C_IN, C_OUT, LEVEL, seed=0)
    ref = tree.reference(x)

    # bf16 MXU inputs with f32 accumulation: quantization noise only (semantics are
    # exact); 4e-2 tolerance gives ~3x margin over the expected worst-case bf16 error
    # accumulated over the 6 fused matmul layers.
    fwd = jax.jit(lambda v: tree(v))
    out = fwd(x)
    jax.block_until_ready(out)
    assert out.shape == (N, C_OUT, H, W), out.shape
    max_err = float(jnp.max(jnp.abs(out - ref)))
    assert jnp.allclose(out, ref, atol=4e-2, rtol=4e-2), max_err

    # Also exercise the level <= 0 (single leaf block) code path.
    leaf = build_tree(C_IN, C_OUT, 0, seed=1)
    out_leaf = jax.jit(lambda v: leaf(v))(x)
    jax.block_until_ready(out_leaf)
    ref_leaf = leaf.reference(x)
    assert jnp.allclose(out_leaf, ref_leaf, atol=4e-2, rtol=4e-2), (
        float(jnp.max(jnp.abs(out_leaf - ref_leaf))))

    print("KERNEL_OK")
</pallas_src>

<mosaic_0001>
module attributes {stable_mosaic.version = 11 : i64} {
  func.func @_tree_kernel(%arg0: i32, %arg1: memref<9x256xf32, #tpu.memory_space<vmem>>, %arg2: memref<1x8x256xf32, #tpu.memory_space<vmem>>, %arg3: memref<16x72xbf16, #tpu.memory_space<vmem>>, %arg4: memref<16x1xf32, #tpu.memory_space<vmem>>, %arg5: memref<16x144xbf16, #tpu.memory_space<vmem>>, %arg6: memref<16x1xf32, #tpu.memory_space<vmem>>, %arg7: memref<16x32xbf16, #tpu.memory_space<vmem>>, %arg8: memref<16x1xf32, #tpu.memory_space<vmem>>, %arg9: memref<16x144xbf16, #tpu.memory_space<vmem>>, %arg10: memref<16x1xf32, #tpu.memory_space<vmem>>, %arg11: memref<16x144xbf16, #tpu.memory_space<vmem>>, %arg12: memref<16x1xf32, #tpu.memory_space<vmem>>, %arg13: memref<16x48xbf16, #tpu.memory_space<vmem>>, %arg14: memref<16x1xf32, #tpu.memory_space<vmem>>, %arg15: memref<1x16x256xf32, #tpu.memory_space<vmem>>) attributes {dimension_semantics = [#tpu.dimension_semantics<parallel>], iteration_bounds = array<i64: 2>, scalar_prefetch = 0 : i64, scratch_operands = 0 : i64, tpu.core_type = #tpu.core_type<tc>, window_params = [{pipeline_mode = #tpu.pipeline_mode<synchronous>, transform_indices = @transform_0, window_bounds = array<i64: 9, 256>}, {transform_indices = @transform_1, window_bounds = array<i64: 1, 8, 256>}, {pipeline_mode = #tpu.pipeline_mode<synchronous>, transform_indices = @transform_2, window_bounds = array<i64: 16, 72>}, {pipeline_mode = #tpu.pipeline_mode<synchronous>, transform_indices = @transform_3, window_bounds = array<i64: 16, 1>}, {pipeline_mode = #tpu.pipeline_mode<synchronous>, transform_indices = @transform_4, window_bounds = array<i64: 16, 144>}, {pipeline_mode = #tpu.pipeline_mode<synchronous>, transform_indices = @transform_5, window_bounds = array<i64: 16, 1>}, {pipeline_mode = #tpu.pipeline_mode<synchronous>, transform_indices = @transform_6, window_bounds = array<i64: 16, 32>}, {pipeline_mode = #tpu.pipeline_mode<synchronous>, transform_indices = @transform_7, window_bounds = array<i64: 16, 1>}, {pipeline_mode = #tpu.pipeline_mode<synchronous>, transform_indices = @transform_8, window_bounds = array<i64: 16, 144>}, {pipeline_mode = #tpu.pipeline_mode<synchronous>, transform_indices = @transform_9, window_bounds = array<i64: 16, 1>}, {pipeline_mode = #tpu.pipeline_mode<synchronous>, transform_indices = @transform_10, window_bounds = array<i64: 16, 144>}, {pipeline_mode = #tpu.pipeline_mode<synchronous>, transform_indices = @transform_11, window_bounds = array<i64: 16, 1>}, {pipeline_mode = #tpu.pipeline_mode<synchronous>, transform_indices = @transform_12, window_bounds = array<i64: 16, 48>}, {pipeline_mode = #tpu.pipeline_mode<synchronous>, transform_indices = @transform_13, window_bounds = array<i64: 16, 1>}, {transform_indices = @transform_14, window_bounds = array<i64: 1, 16, 256>}]} {
    %c0 = arith.constant 0 : index
    %c0_0 = arith.constant 0 : index
    %0 = vector.load %arg1[%c0, %c0_0] : memref<9x256xf32, #tpu.memory_space<vmem>>, vector<1x256xf32>
    %c1 = arith.constant 1 : index
    %c0_1 = arith.constant 0 : index
    %1 = vector.load %arg1[%c1, %c0_1] : memref<9x256xf32, #tpu.memory_space<vmem>>, vector<1x256xf32>
    %c2 = arith.constant 2 : index
    %c0_2 = arith.constant 0 : index
    %2 = vector.load %arg1[%c2, %c0_2] : memref<9x256xf32, #tpu.memory_space<vmem>>, vector<1x256xf32>
    %c3 = arith.constant 3 : index
    %c0_3 = arith.constant 0 : index
    %3 = vector.load %arg1[%c3, %c0_3] : memref<9x256xf32, #tpu.memory_space<vmem>>, vector<1x256xf32>
    %c5 = arith.constant 5 : index
    %c0_4 = arith.constant 0 : index
    %4 = vector.load %arg1[%c5, %c0_4] : memref<9x256xf32, #tpu.memory_space<vmem>>, vector<1x256xf32>
    %c6 = arith.constant 6 : index
    %c0_5 = arith.constant 0 : index
    %5 = vector.load %arg1[%c6, %c0_5] : memref<9x256xf32, #tpu.memory_space<vmem>>, vector<1x256xf32>
    %c7 = arith.constant 7 : index
    %c0_6 = arith.constant 0 : index
    %6 = vector.load %arg1[%c7, %c0_6] : memref<9x256xf32, #tpu.memory_space<vmem>>, vector<1x256xf32>
    %c8 = arith.constant 8 : index
    %c0_7 = arith.constant 0 : index
    %7 = vector.load %arg1[%c8, %c0_7] : memref<9x256xf32, #tpu.memory_space<vmem>>, vector<1x256xf32>
    %c0_8 = arith.constant 0 : index
    %c0_9 = arith.constant 0 : index
    %c0_10 = arith.constant 0 : index
    %8 = vector.load %arg2[%c0_8, %c0_9, %c0_10] : memref<1x8x256xf32, #tpu.memory_space<vmem>>, vector<1x8x256xf32>
    %9 = vector.shape_cast %8 : vector<1x8x256xf32> to vector<8x256xf32>
    %c17_i32 = arith.constant 17 : i32
    %10 = tpu.dynamic_rotate %9 by %c17_i32 dim 1 : vector<8x256xf32>, i32 -> vector<8x256xf32>
    %11 = vector.broadcast %0 : vector<1x256xf32> to vector<8x256xf32>
    %12 = arith.mulf %10, %11 : vector<8x256xf32>
    %c16_i32 = arith.constant 16 : i32
    %13 = tpu.dynamic_rotate %9 by %c16_i32 dim 1 : vector<8x256xf32>, i32 -> vector<8x256xf32>
    %14 = vector.broadcast %1 : vector<1x256xf32> to vector<8x256xf32>
    %15 = arith.mulf %13, %14 : vector<8x256xf32>
    %c15_i32 = arith.constant 15 : i32
    %16 = tpu.dynamic_rotate %9 by %c15_i32 dim 1 : vector<8x256xf32>, i32 -> vector<8x256xf32>
    %17 = vector.broadcast %2 : vector<1x256xf32> to vector<8x256xf32>
    %18 = arith.mulf %16, %17 : vector<8x256xf32>
    %c1_i32 = arith.constant 1 : i32
    %19 = tpu.dynamic_rotate %9 by %c1_i32 dim 1 : vector<8x256xf32>, i32 -> vector<8x256xf32>
    %20 = vector.broadcast %3 : vector<1x256xf32> to vector<8x256xf32>
    %21 = arith.mulf %19, %20 : vector<8x256xf32>
    %c255_i32 = arith.constant 255 : i32
    %22 = tpu.dynamic_rotate %9 by %c255_i32 dim 1 : vector<8x256xf32>, i32 -> vector<8x256xf32>
    %23 = vector.broadcast %4 : vector<1x256xf32> to vector<8x256xf32>
    %24 = arith.mulf %22, %23 : vector<8x256xf32>
    %c241_i32 = arith.constant 241 : i32
    %25 = tpu.dynamic_rotate %9 by %c241_i32 dim 1 : vector<8x256xf32>, i32 -> vector<8x256xf32>
    %26 = vector.broadcast %5 : vector<1x256xf32> to vector<8x256xf32>
    %27 = arith.mulf %25, %26 : vector<8x256xf32>
    %c240_i32 = arith.constant 240 : i32
    %28 = tpu.dynamic_rotate %9 by %c240_i32 dim 1 : vector<8x256xf32>, i32 -> vector<8x256xf32>
    %29 = vector.broadcast %6 : vector<1x256xf32> to vector<8x256xf32>
    %30 = arith.mulf %28, %29 : vector<8x256xf32>
    %c239_i32 = arith.constant 239 : i32
    %31 = tpu.dynamic_rotate %9 by %c239_i32 dim 1 : vector<8x256xf32>, i32 -> vector<8x256xf32>
    %32 = vector.broadcast %7 : vector<1x256xf32> to vector<8x256xf32>
    %33 = arith.mulf %31, %32 : vector<8x256xf32>
    %34 = tpu.concatenate %12, %15, %18, %21, %9, %24, %27, %30, %33 in 0 : vector<8x256xf32>, vector<8x256xf32>, vector<8x256xf32>, vector<8x256xf32>, vector<8x256xf32>, vector<8x256xf32>, vector<8x256xf32>, vector<8x256xf32>, vector<8x256xf32> -> vector<72x256xf32>
    %35 = arith.truncf %34 : vector<72x256xf32> to vector<72x256xbf16>
    %c0_11 = arith.constant 0 : index
    %c0_12 = arith.constant 0 : index
    %36 = vector.load %arg3[%c0_11, %c0_12] : memref<16x72xbf16, #tpu.memory_space<vmem>>, vector<16x72xbf16>
    %cst = arith.constant dense<0.000000e+00> : vector<16x256xf32>
    %37 = tpu.matmul %36, %35, %cst {dimension_numbers = #tpu.dot_dimension_numbers<[1], [0], [0], [1], [0, 0, 1, 1], [], []>} : vector<16x72xbf16>, vector<72x256xbf16>, vector<16x256xf32> -> vector<16x256xf32>
    %c0_13 = arith.constant 0 : index
    %c0_14 = arith.constant 0 : index
    %38 = vector.load %arg4[%c0_13, %c0_14] : memref<16x1xf32, #tpu.memory_space<vmem>>, vector<16x1xf32>
    %39 = vector.broadcast %38 : vector<16x1xf32> to vector<16x256xf32>
    %40 = arith.addf %37, %39 : vector<16x256xf32>
    %cst_15 = arith.constant 0.000000e+00 : f32
    %41 = vector.broadcast %cst_15 : f32 to vector<16x256xf32>
    %42 = arith.maximumf %40, %41 : vector<16x256xf32>
    %c17_i32_16 = arith.constant 17 : i32
    %43 = tpu.dynamic_rotate %42 by %c17_i32_16 dim 1 : vector<16x256xf32>, i32 -> vector<16x256xf32>
    %44 = vector.broadcast %0 : vector<1x256xf32> to vector<16x256xf32>
    %45 = arith.mulf %43, %44 : vector<16x256xf32>
    %c16_i32_17 = arith.constant 16 : i32
    %46 = tpu.dynamic_rotate %42 by %c16_i32_17 dim 1 : vector<16x256xf32>, i32 -> vector<16x256xf32>
    %47 = vector.broadcast %1 : vector<1x256xf32> to vector<16x256xf32>
    %48 = arith.mulf %46, %47 : vector<16x256xf32>
    %c15_i32_18 = arith.constant 15 : i32
    %49 = tpu.dynamic_rotate %42 by %c15_i32_18 dim 1 : vector<16x256xf32>, i32 -> vector<16x256xf32>
    %50 = vector.broadcast %2 : vector<1x256xf32> to vector<16x256xf32>
    %51 = arith.mulf %49, %50 : vector<16x256xf32>
    %c1_i32_19 = arith.constant 1 : i32
    %52 = tpu.dynamic_rotate %42 by %c1_i32_19 dim 1 : vector<16x256xf32>, i32 -> vector<16x256xf32>
    %53 = vector.broadcast %3 : vector<1x256xf32> to vector<16x256xf32>
    %54 = arith.mulf %52, %53 : vector<16x256xf32>
    %c255_i32_20 = arith.constant 255 : i32
    %55 = tpu.dynamic_rotate %42 by %c255_i32_20 dim 1 : vector<16x256xf32>, i32 -> vector<16x256xf32>
    %56 = vector.broadcast %4 : vector<1x256xf32> to vector<16x256xf32>
    %57 = arith.mulf %55, %56 : vector<16x256xf32>
    %c241_i32_21 = arith.constant 241 : i32
    %58 = tpu.dynamic_rotate %42 by %c241_i32_21 dim 1 : vector<16x256xf32>, i32 -> vector<16x256xf32>
    %59 = vector.broadcast %5 : vector<1x256xf32> to vector<16x256xf32>
    %60 = arith.mulf %58, %59 : vector<16x256xf32>
    %c240_i32_22 = arith.constant 240 : i32
    %61 = tpu.dynamic_rotate %42 by %c240_i32_22 dim 1 : vector<16x256xf32>, i32 -> vector<16x256xf32>
    %62 = vector.broadcast %6 : vector<1x256xf32> to vector<16x256xf32>
    %63 = arith.mulf %61, %62 : vector<16x256xf32>
    %c239_i32_23 = arith.constant 239 : i32
    %64 = tpu.dynamic_rotate %42 by %c239_i32_23 dim 1 : vector<16x256xf32>, i32 -> vector<16x256xf32>
    %65 = vector.broadcast %7 : vector<1x256xf32> to vector<16x256xf32>
    %66 = arith.mulf %64, %65 : vector<16x256xf32>
    %67 = tpu.concatenate %45, %48, %51, %54, %42, %57, %60, %63, %66 in 0 : vector<16x256xf32>, vector<16x256xf32>, vector<16x256xf32>, vector<16x256xf32>, vector<16x256xf32>, vector<16x256xf32>, vector<16x256xf32>, vector<16x256xf32>, vector<16x256xf32> -> vector<144x256xf32>
    %68 = arith.truncf %67 : vector<144x256xf32> to vector<144x256xbf16>
    %c0_24 = arith.constant 0 : index
    %c0_25 = arith.constant 0 : index
    %69 = vector.load %arg5[%c0_24, %c0_25] : memref<16x144xbf16, #tpu.memory_space<vmem>>, vector<16x144xbf16>
    %cst_26 = arith.constant dense<0.000000e+00> : vector<16x256xf32>
    %70 = tpu.matmul %69, %68, %cst_26 {dimension_numbers = #tpu.dot_dimension_numbers<[1], [0], [0], [1], [0, 0, 1, 1], [], []>} : vector<16x144xbf16>, vector<144x256xbf16>, vector<16x256xf32> -> vector<16x256xf32>
    %c0_27 = arith.constant 0 : index
    %c0_28 = arith.constant 0 : index
    %71 = vector.load %arg6[%c0_27, %c0_28] : memref<16x1xf32, #tpu.memory_space<vmem>>, vector<16x1xf32>
    %72 = vector.broadcast %71 : vector<16x1xf32> to vector<16x256xf32>
    %73 = arith.addf %70, %72 : vector<16x256xf32>
    %cst_29 = arith.constant 0.000000e+00 : f32
    %74 = vector.broadcast %cst_29 : f32 to vector<16x256xf32>
    %75 = arith.maximumf %73, %74 : vector<16x256xf32>
    %76 = tpu.concatenate %42, %75 in 0 : vector<16x256xf32>, vector<16x256xf32> -> vector<32x256xf32>
    %77 = arith.truncf %76 : vector<32x256xf32> to vector<32x256xbf16>
    %c0_30 = arith.constant 0 : index
    %c0_31 = arith.constant 0 : index
    %78 = vector.load %arg7[%c0_30, %c0_31] : memref<16x32xbf16, #tpu.memory_space<vmem>>, vector<16x32xbf16>
    %cst_32 = arith.constant dense<0.000000e+00> : vector<16x256xf32>
    %79 = tpu.matmul %78, %77, %cst_32 {dimension_numbers = #tpu.dot_dimension_numbers<[1], [0], [0], [1], [0, 0, 1, 1], [], []>} : vector<16x32xbf16>, vector<32x256xbf16>, vector<16x256xf32> -> vector<16x256xf32>
    %c0_33 = arith.constant 0 : index
    %c0_34 = arith.constant 0 : index
    %80 = vector.load %arg8[%c0_33, %c0_34] : memref<16x1xf32, #tpu.memory_space<vmem>>, vector<16x1xf32>
    %81 = vector.broadcast %80 : vector<16x1xf32> to vector<16x256xf32>
    %82 = arith.addf %79, %81 : vector<16x256xf32>
    %c17_i32_35 = arith.constant 17 : i32
    %83 = tpu.dynamic_rotate %82 by %c17_i32_35 dim 1 : vector<16x256xf32>, i32 -> vector<16x256xf32>
    %84 = vector.broadcast %0 : vector<1x256xf32> to vector<16x256xf32>
    %85 = arith.mulf %83, %84 : vector<16x256xf32>
    %c16_i32_36 = arith.constant 16 : i32
    %86 = tpu.dynamic_rotate %82 by %c16_i32_36 dim 1 : vector<16x256xf32>, i32 -> vector<16x256xf32>
    %87 = vector.broadcast %1 : vector<1x256xf32> to vector<16x256xf32>
    %88 = arith.mulf %86, %87 : vector<16x256xf32>
    %c15_i32_37 = arith.constant 15 : i32
    %89 = tpu.dynamic_rotate %82 by %c15_i32_37 dim 1 : vector<16x256xf32>, i32 -> vector<16x256xf32>
    %90 = vector.broadcast %2 : vector<1x256xf32> to vector<16x256xf32>
    %91 = arith.mulf %89, %90 : vector<16x256xf32>
    %c1_i32_38 = arith.constant 1 : i32
    %92 = tpu.dynamic_rotate %82 by %c1_i32_38 dim 1 : vector<16x256xf32>, i32 -> vector<16x256xf32>
    %93 = vector.broadcast %3 : vector<1x256xf32> to vector<16x256xf32>
    %94 = arith.mulf %92, %93 : vector<16x256xf32>
    %c255_i32_39 = arith.constant 255 : i32
    %95 = tpu.dynamic_rotate %82 by %c255_i32_39 dim 1 : vector<16x256xf32>, i32 -> vector<16x256xf32>
    %96 = vector.broadcast %4 : vector<1x256xf32> to vector<16x256xf32>
    %97 = arith.mulf %95, %96 : vector<16x256xf32>
    %c241_i32_40 = arith.constant 241 : i32
    %98 = tpu.dynamic_rotate %82 by %c241_i32_40 dim 1 : vector<16x256xf32>, i32 -> vector<16x256xf32>
    %99 = vector.broadcast %5 : vector<1x256xf32> to vector<16x256xf32>
    %100 = arith.mulf %98, %99 : vector<16x256xf32>
    %c240_i32_41 = arith.constant 240 : i32
    %101 = tpu.dynamic_rotate %82 by %c240_i32_41 dim 1 : vector<16x256xf32>, i32 -> vector<16x256xf32>
    %102 = vector.broadcast %6 : vector<1x256xf32> to vector<16x256xf32>
    %103 = arith.mulf %101, %102 : vector<16x256xf32>
    %c239_i32_42 = arith.constant 239 : i32
    %104 = tpu.dynamic_rotate %82 by %c239_i32_42 dim 1 : vector<16x256xf32>, i32 -> vector<16x256xf32>
    %105 = vector.broadcast %7 : vector<1x256xf32> to vector<16x256xf32>
    %106 = arith.mulf %104, %105 : vector<16x256xf32>
    %107 = tpu.concatenate %85, %88, %91, %94, %82, %97, %100, %103, %106 in 0 : vector<16x256xf32>, vector<16x256xf32>, vector<16x256xf32>, vector<16x256xf32>, vector<16x256xf32>, vector<16x256xf32>, vector<16x256xf32>, vector<16x256xf32>, vector<16x256xf32> -> vector<144x256xf32>
    %108 = arith.truncf %107 : vector<144x256xf32> to vector<144x256xbf16>
    %c0_43 = arith.constant 0 : index
    %c0_44 = arith.constant 0 : index
    %109 = vector.load %arg9[%c0_43, %c0_44] : memref<16x144xbf16, #tpu.memory_space<vmem>>, vector<16x144xbf16>
    %cst_45 = arith.constant dense<0.000000e+00> : vector<16x256xf32>
    %110 = tpu.matmul %109, %108, %cst_45 {dimension_numbers = #tpu.dot_dimension_numbers<[1], [0], [0], [1], [0, 0, 1, 1], [], []>} : vector<16x144xbf16>, vector<144x256xbf16>, vector<16x256xf32> -> vector<16x256xf32>
    %c0_46 = arith.constant 0 : index
    %c0_47 = arith.constant 0 : index
    %111 = vector.load %arg10[%c0_46, %c0_47] : memref<16x1xf32, #tpu.memory_space<vmem>>, vector<16x1xf32>
    %112 = vector.broadcast %111 : vector<16x1xf32> to vector<16x256xf32>
    %113 = arith.addf %110, %112 : vector<16x256xf32>
    %cst_48 = arith.constant 0.000000e+00 : f32
    %114 = vector.broadcast %cst_48 : f32 to vector<16x256xf32>
    %115 = arith.maximumf %113, %114 : vector<16x256xf32>
    %c17_i32_49 = arith.constant 17 : i32
    %116 = tpu.dynamic_rotate %115 by %c17_i32_49 dim 1 : vector<16x256xf32>, i32 -> vector<16x256xf32>
    %117 = vector.broadcast %0 : vector<1x256xf32> to vector<16x256xf32>
    %118 = arith.mulf %116, %117 : vector<16x256xf32>
    %c16_i32_50 = arith.constant 16 : i32
    %119 = tpu.dynamic_rotate %115 by %c16_i32_50 dim 1 : vector<16x256xf32>, i32 -> vector<16x256xf32>
    %120 = vector.broadcast %1 : vector<1x256xf32> to vector<16x256xf32>
    %121 = arith.mulf %119, %120 : vector<16x256xf32>
    %c15_i32_51 = arith.constant 15 : i32
    %122 = tpu.dynamic_rotate %115 by %c15_i32_51 dim 1 : vector<16x256xf32>, i32 -> vector<16x256xf32>
    %123 = vector.broadcast %2 : vector<1x256xf32> to vector<16x256xf32>
    %124 = arith.mulf %122, %123 : vector<16x256xf32>
    %c1_i32_52 = arith.constant 1 : i32
    %125 = tpu.dynamic_rotate %115 by %c1_i32_52 dim 1 : vector<16x256xf32>, i32 -> vector<16x256xf32>
    %126 = vector.broadcast %3 : vector<1x256xf32> to vector<16x256xf32>
    %127 = arith.mulf %125, %126 : vector<16x256xf32>
    %c255_i32_53 = arith.constant 255 : i32
    %128 = tpu.dynamic_rotate %115 by %c255_i32_53 dim 1 : vector<16x256xf32>, i32 -> vector<16x256xf32>
    %129 = vector.broadcast %4 : vector<1x256xf32> to vector<16x256xf32>
    %130 = arith.mulf %128, %129 : vector<16x256xf32>
    %c241_i32_54 = arith.constant 241 : i32
    %131 = tpu.dynamic_rotate %115 by %c241_i32_54 dim 1 : vector<16x256xf32>, i32 -> vector<16x256xf32>
    %132 = vector.broadcast %5 : vector<1x256xf32> to vector<16x256xf32>
    %133 = arith.mulf %131, %132 : vector<16x256xf32>
    %c240_i32_55 = arith.constant 240 : i32
    %134 = tpu.dynamic_rotate %115 by %c240_i32_55 dim 1 : vector<16x256xf32>, i32 -> vector<16x256xf32>
    %135 = vector.broadcast %6 : vector<1x256xf32> to vector<16x256xf32>
    %136 = arith.mulf %134, %135 : vector<16x256xf32>
    %c239_i32_56 = arith.constant 239 : i32
    %137 = tpu.dynamic_rotate %115 by %c239_i32_56 dim 1 : vector<16x256xf32>, i32 -> vector<16x256xf32>
    %138 = vector.broadcast %7 : vector<1x256xf32> to vector<16x256xf32>
    %139 = arith.mulf %137, %138 : vector<16x256xf32>
    %140 = tpu.concatenate %118, %121, %124, %127, %115, %130, %133, %136, %139 in 0 : vector<16x256xf32>, vector<16x256xf32>, vector<16x256xf32>, vector<16x256xf32>, vector<16x256xf32>, vector<16x256xf32>, vector<16x256xf32>, vector<16x256xf32>, vector<16x256xf32> -> vector<144x256xf32>
    %141 = arith.truncf %140 : vector<144x256xf32> to vector<144x256xbf16>
    %c0_57 = arith.constant 0 : index
    %c0_58 = arith.constant 0 : index
    %142 = vector.load %arg11[%c0_57, %c0_58] : memref<16x144xbf16, #tpu.memory_space<vmem>>, vector<16x144xbf16>
    %cst_59 = arith.constant dense<0.000000e+00> : vector<16x256xf32>
    %143 = tpu.matmul %142, %141, %cst_59 {dimension_numbers = #tpu.dot_dimension_numbers<[1], [0], [0], [1], [0, 0, 1, 1], [], []>} : vector<16x144xbf16>, vector<144x256xbf16>, vector<16x256xf32> -> vector<16x256xf32>
    %c0_60 = arith.constant 0 : index
    %c0_61 = arith.constant 0 : index
    %144 = vector.load %arg12[%c0_60, %c0_61] : memref<16x1xf32, #tpu.memory_space<vmem>>, vector<16x1xf32>
    %145 = vector.broadcast %144 : vector<16x1xf32> to vector<16x256xf32>
    %146 = arith.addf %143, %145 : vector<16x256xf32>
    %cst_62 = arith.constant 0.000000e+00 : f32
    %147 = vector.broadcast %cst_62 : f32 to vector<16x256xf32>
    %148 = arith.maximumf %146, %147 : vector<16x256xf32>
    %149 = tpu.concatenate %82, %115, %148 in 0 : vector<16x256xf32>, vector<16x256xf32>, vector<16x256xf32> -> vector<48x256xf32>
    %150 = arith.truncf %149 : vector<48x256xf32> to vector<48x256xbf16>
    %c0_63 = arith.constant 0 : index
    %c0_64 = arith.constant 0 : index
    %151 = vector.load %arg13[%c0_63, %c0_64] : memref<16x48xbf16, #tpu.memory_space<vmem>>, vector<16x48xbf16>
    %cst_65 = arith.constant dense<0.000000e+00> : vector<16x256xf32>
    %152 = tpu.matmul %151, %150, %cst_65 {dimension_numbers = #tpu.dot_dimension_numbers<[1], [0], [0], [1], [0, 0, 1, 1], [], []>} : vector<16x48xbf16>, vector<48x256xbf16>, vector<16x256xf32> -> vector<16x256xf32>
    %c0_66 = arith.constant 0 : index
    %c0_67 = arith.constant 0 : index
    %153 = vector.load %arg14[%c0_66, %c0_67] : memref<16x1xf32, #tpu.memory_space<vmem>>, vector<16x1xf32>
    %154 = vector.broadcast %153 : vector<16x1xf32> to vector<16x256xf32>
    %155 = arith.addf %152, %154 : vector<16x256xf32>
    %c0_68 = arith.constant 0 : index
    %c0_69 = arith.constant 0 : index
    %c0_70 = arith.constant 0 : index
    %156 = vector.load %arg15[%c0_68, %c0_69, %c0_70] : memref<1x16x256xf32, #tpu.memory_space<vmem>>, vector<1x16x256xf32>
    %157 = vector.shape_cast %156 : vector<1x16x256xf32> to vector<16x256xf32>
    %158 = vector.shape_cast %155 : vector<16x256xf32> to vector<1x16x256xf32>
    tpu.vector_store %arg15[%c0_68, %c0_69, %c0_70], %158 {strides = array<i32>} : memref<1x16x256xf32, #tpu.memory_space<vmem>>, vector<1x16x256xf32>,
    return
  }
  func.func @transform_0(%arg0: i32) -> (i32, i32) {
    %c0_i32 = arith.constant 0 : i32
    %c0_i32_0 = arith.constant 0 : i32
    %c0_i32_1 = arith.constant 0 : i32
    return %c0_i32, %c0_i32_0 : i32, i32
  }
  func.func @transform_1(%arg0: i32) -> (i32, i32, i32) {
    %c0_i32 = arith.constant 0 : i32
    %c0_i32_0 = arith.constant 0 : i32
    %c0_i32_1 = arith.constant 0 : i32
    return %arg0, %c0_i32, %c0_i32_0 : i32, i32, i32
  }
  func.func @transform_2(%arg0: i32) -> (i32, i32) {
    %c0_i32 = arith.constant 0 : i32
    %c0_i32_0 = arith.constant 0 : i32
    %c0_i32_1 = arith.constant 0 : i32
    return %c0_i32, %c0_i32_0 : i32, i32
  }
  func.func @transform_3(%arg0: i32) -> (i32, i32) {
    %c0_i32 = arith.constant 0 : i32
    %c0_i32_0 = arith.constant 0 : i32
    %c0_i32_1 = arith.constant 0 : i32
    return %c0_i32, %c0_i32_0 : i32, i32
  }
  func.func @transform_4(%arg0: i32) -> (i32, i32) {
    %c0_i32 = arith.constant 0 : i32
    %c0_i32_0 = arith.constant 0 : i32
    %c0_i32_1 = arith.constant 0 : i32
    return %c0_i32, %c0_i32_0 : i32, i32
  }
  func.func @transform_5(%arg0: i32) -> (i32, i32) {
    %c0_i32 = arith.constant 0 : i32
    %c0_i32_0 = arith.constant 0 : i32
    %c0_i32_1 = arith.constant 0 : i32
    return %c0_i32, %c0_i32_0 : i32, i32
  }
  func.func @transform_6(%arg0: i32) -> (i32, i32) {
    %c0_i32 = arith.constant 0 : i32
    %c0_i32_0 = arith.constant 0 : i32
    %c0_i32_1 = arith.constant 0 : i32
    return %c0_i32, %c0_i32_0 : i32, i32
  }
  func.func @transform_7(%arg0: i32) -> (i32, i32) {
    %c0_i32 = arith.constant 0 : i32
    %c0_i32_0 = arith.constant 0 : i32
    %c0_i32_1 = arith.constant 0 : i32
    return %c0_i32, %c0_i32_0 : i32, i32
  }
  func.func @transform_8(%arg0: i32) -> (i32, i32) {
    %c0_i32 = arith.constant 0 : i32
    %c0_i32_0 = arith.constant 0 : i32
    %c0_i32_1 = arith.constant 0 : i32
    return %c0_i32, %c0_i32_0 : i32, i32
  }
  func.func @transform_9(%arg0: i32) -> (i32, i32) {
    %c0_i32 = arith.constant 0 : i32
    %c0_i32_0 = arith.constant 0 : i32
    %c0_i32_1 = arith.constant 0 : i32
    return %c0_i32, %c0_i32_0 : i32, i32
  }
  func.func @transform_10(%arg0: i32) -> (i32, i32) {
    %c0_i32 = arith.constant 0 : i32
    %c0_i32_0 = arith.constant 0 : i32
    %c0_i32_1 = arith.constant 0 : i32
    return %c0_i32, %c0_i32_0 : i32, i32
  }
  func.func @transform_11(%arg0: i32) -> (i32, i32) {
    %c0_i32 = arith.constant 0 : i32
    %c0_i32_0 = arith.constant 0 : i32
    %c0_i32_1 = arith.constant 0 : i32
    return %c0_i32, %c0_i32_0 : i32, i32
  }
  func.func @transform_12(%arg0: i32) -> (i32, i32) {
    %c0_i32 = arith.constant 0 : i32
    %c0_i32_0 = arith.constant 0 : i32
    %c0_i32_1 = arith.constant 0 : i32
    return %c0_i32, %c0_i32_0 : i32, i32
  }
  func.func @transform_13(%arg0: i32) -> (i32, i32) {
    %c0_i32 = arith.constant 0 : i32
    %c0_i32_0 = arith.constant 0 : i32
    %c0_i32_1 = arith.constant 0 : i32
    return %c0_i32, %c0_i32_0 : i32, i32
  }
  func.func @transform_14(%arg0: i32) -> (i32, i32, i32) {
    %c0_i32 = arith.constant 0 : i32
    %c0_i32_0 = arith.constant 0 : i32
    %c0_i32_1 = arith.constant 0 : i32
    return %arg0, %c0_i32, %c0_i32_0 : i32, i32, i32
  }
}

</mosaic_0001>

<llo_original>
// kernel: _lambda_.1
$region0: #{_lambda_.1}
  #allocation0 [shape = 'u32[]', space=smem, size = 0x4, offset = 0x4, fixed_abs, tag = 'smem constant byte address 0x4 - core index']
  #allocation1 [shape = 'u32[144,128]{1,0:T(1,128)}', space=vmem, size = 0x12000, scoped, tag = 'internal scratch']
  %s0 = inlined_call_operand.vmem [shape: f32[9,256], index: 0, kind: input, shape index: {}]
  %s1 = inlined_call_operand.vmem [shape: f32[2,8,256], index: 1, kind: input, shape index: {}]
  %s2 = inlined_call_operand.vmem [shape: bf16[16,72], index: 2, kind: input, shape index: {}]
  %s3 = inlined_call_operand.vmem [shape: f32[16,1], index: 3, kind: input, shape index: {}]
  %s4 = inlined_call_operand.vmem [shape: bf16[16,144], index: 4, kind: input, shape index: {}]
  %s5 = inlined_call_operand.vmem [shape: f32[16,1], index: 5, kind: input, shape index: {}]
  %s6 = inlined_call_operand.vmem [shape: bf16[16,32], index: 6, kind: input, shape index: {}]
  %s7 = inlined_call_operand.vmem [shape: f32[16,1], index: 7, kind: input, shape index: {}]
  %s8 = inlined_call_operand.vmem [shape: bf16[16,144], index: 8, kind: input, shape index: {}]
  %s9 = inlined_call_operand.vmem [shape: f32[16,1], index: 9, kind: input, shape index: {}]
  %s10 = inlined_call_operand.vmem [shape: bf16[16,144], index: 10, kind: input, shape index: {}]
  %s11 = inlined_call_operand.vmem [shape: f32[16,1], index: 11, kind: input, shape index: {}]
  %s12 = inlined_call_operand.vmem [shape: bf16[16,48], index: 12, kind: input, shape index: {}]
  %s13 = inlined_call_operand.vmem [shape: f32[16,1], index: 13, kind: input, shape index: {}]
  %s14 = inlined_call_operand.vmem [shape: f32[2,16,256], index: 14, kind: output, shape index: {}]
  %s15 = sld [smem:[#allocation0]]
  $region89: #{_lambda_.1} parent=0
    _
  %s17 = ssub.s32 1, %s15
  %s18 = scalar_select 0, %s17, %s15
  loop: start=0, step=1, limit=4
  $region2: #{_lambda_.1} parent=0 // loop_pre_header
    _
  $region3: #{_lambda_.1} parent=0 // loop_header
    %s20 = sphi 0, %s24
    %p21 = scmp.ge.s32.totalorder %s20, 4
    %s28 = sphi 0, %s28
    %s30 = sphi 0, %s28
    %s31 = sphi 0, %s30
    %s45 = sphi 0, %s31
    %s51 = sphi 0, %s53
    %s54 = sphi 0, %s51
    %s55 = sphi 0, %s54
    %s71 = sphi 0, %s55
    %s75 = sphi 0, %s75
    %s77 = sphi 0, %s75
    %s78 = sphi 0, %s77
    %s92 = sphi 0, %s78
    %s96 = sphi 0, %s96
    %s98 = sphi 0, %s96
    %s99 = sphi 0, %s98
    %s113 = sphi 0, %s99
    %s117 = sphi 0, %s117
    %s119 = sphi 0, %s117
    %s120 = sphi 0, %s119
    %s134 = sphi 0, %s120
    %s138 = sphi 0, %s138
    %s140 = sphi 0, %s138
    %s141 = sphi 0, %s140
    %s155 = sphi 0, %s141
    %s159 = sphi 0, %s159
    %s161 = sphi 0, %s159
    %s162 = sphi 0, %s161
    %s176 = sphi 0, %s162
    %s180 = sphi 0, %s180
    %s182 = sphi 0, %s180
    %s183 = sphi 0, %s182
    %s197 = sphi 0, %s183
    %s201 = sphi 0, %s201
    %s203 = sphi 0, %s201
    %s204 = sphi 0, %s203
    %s218 = sphi 0, %s204
    %s222 = sphi 0, %s222
    %s224 = sphi 0, %s222
    %s225 = sphi 0, %s224
    %s239 = sphi 0, %s225
    %s243 = sphi 0, %s243
    %s245 = sphi 0, %s243
    %s246 = sphi 0, %s245
    %s260 = sphi 0, %s246
    %s264 = sphi 0, %s264
    %s266 = sphi 0, %s264
    %s267 = sphi 0, %s266
    %s281 = sphi 0, %s267
    %s285 = sphi 0, %s285
    %s287 = sphi 0, %s285
    %s288 = sphi 0, %s287
    %s302 = sphi 0, %s288
    %s306 = sphi 0, %s306
    %s308 = sphi 0, %s306
    %s309 = sphi 0, %s308
    %s323 = sphi 0, %s309
    %s329 = sphi 0, %s331
    %s332 = sphi 0, %s329
    %s333 = sphi 0, %s332
    %s349 = sphi 0, %s333
  $region4: #{_lambda_.1} parent=0 // loop_header_branch
    %23 = sbr.rel (%p21) target = $region8
  $region5: #{_lambda_.1} parent=0 // loop_body
    %s25 = ssub.s32 %s20, 1
    %s26 = ssub.s32 %s20, 2
    %s27 = sadd.s32 %s20, 1
    %s29 = sadd.s32 %s28, 1
    %p32 = scmp.eq.s32.totalorder %s20, 1
    %p33 = scmp.ne.s32.totalorder %s28, %s30
    %p34 = scmp.eq.s32.totalorder %s20, 0
    %p35 = por %p33, %p34
    %p36 = scmp.ne.s32.totalorder %s28, %s30
    %p37 = scmp.eq.s32.totalorder %s25, 1
    %p38 = por %p36, %p37
    %p39 = scmp.ne.s32.totalorder %s30, %s31
    %p40 = scmp.eq.s32.totalorder %s25, 0
    %p41 = por %p39, %p40
    %p42 = scmp.ne.s32.totalorder %s30, %s31
    %p43 = scmp.eq.s32.totalorder %s26, 1
    %p44 = por %p42, %p43
    %p46 = scmp.ne.s32.totalorder %s31, %s45
    %p47 = scmp.eq.s32.totalorder %s26, 0
    %p48 = por %p46, %p47
    %s49 = ssub.s32 %s20, %s27
    %p50 = scmp.eq.s32.totalorder %s49, 0
    %s52 = sadd.s32 %s51, 1
    %s53 = scalar_select %p50, %s51, %s52
    %p56 = pneg %p50
    %p57 = scmp.eq.s32.totalorder %s20, 1
    %p58 = por %p56, %p57
    %p59 = scmp.ne.s32.totalorder %s51, %s54
    %p60 = scmp.eq.s32.totalorder %s20, 0
    %p61 = por %p59, %p60
    %p62 = scmp.ne.s32.totalorder %s51, %s54
    %p63 = scmp.eq.s32.totalorder %s25, 1
    %p64 = por %p62, %p63
    %p65 = scmp.ne.s32.totalorder %s54, %s55
    %p66 = scmp.eq.s32.totalorder %s25, 0
    %p67 = por %p65, %p66
    %p68 = scmp.ne.s32.totalorder %s54, %s55
    %p69 = scmp.eq.s32.totalorder %s26, 1
    %p70 = por %p68, %p69
    %p72 = scmp.ne.s32.totalorder %s55, %s71
    %p73 = scmp.eq.s32.totalorder %s26, 0
    %p74 = por %p72, %p73
    %s76 = sadd.s32 %s75, 1
    %p79 = scmp.eq.s32.totalorder %s20, 1
    %p80 = scmp.ne.s32.totalorder %s75, %s77
    %p81 = scmp.eq.s32.totalorder %s20, 0
    %p82 = por %p80, %p81
    %p83 = scmp.ne.s32.totalorder %s75, %s77
    %p84 = scmp.eq.s32.totalorder %s25, 1
    %p85 = por %p83, %p84
    %p86 = scmp.ne.s32.totalorder %s77, %s78
    %p87 = scmp.eq.s32.totalorder %s25, 0
    %p88 = por %p86, %p87
    %p89 = scmp.ne.s32.totalorder %s77, %s78
    %p90 = scmp.eq.s32.totalorder %s26, 1
    %p91 = por %p89, %p90
    %p93 = scmp.ne.s32.totalorder %s78, %s92
    %p94 = scmp.eq.s32.totalorder %s26, 0
    %p95 = por %p93, %p94
    %s97 = sadd.s32 %s96, 1
    %p100 = scmp.eq.s32.totalorder %s20, 1
    %p101 = scmp.ne.s32.totalorder %s96, %s98
    %p102 = scmp.eq.s32.totalorder %s20, 0
    %p103 = por %p101, %p102
    %p104 = scmp.ne.s32.totalorder %s96, %s98
    %p105 = scmp.eq.s32.totalorder %s25, 1
    %p106 = por %p104, %p105
    %p107 = scmp.ne.s32.totalorder %s98, %s99
    %p108 = scmp.eq.s32.totalorder %s25, 0
    %p109 = por %p107, %p108
    %p110 = scmp.ne.s32.totalorder %s98, %s99
    %p111 = scmp.eq.s32.totalorder %s26, 1
    %p112 = por %p110, %p111
    %p114 = scmp.ne.s32.totalorder %s99, %s113
    %p115 = scmp.eq.s32.totalorder %s26, 0
    %p116 = por %p114, %p115
    %s118 = sadd.s32 %s117, 1
    %p121 = scmp.eq.s32.totalorder %s20, 1
    %p122 = scmp.ne.s32.totalorder %s117, %s119
    %p123 = scmp.eq.s32.totalorder %s20, 0
    %p124 = por %p122, %p123
    %p125 = scmp.ne.s32.totalorder %s117, %s119
    %p126 = scmp.eq.s32.totalorder %s25, 1
    %p127 = por %p125, %p126
    %p128 = scmp.ne.s32.totalorder %s119, %s120
    %p129 = scmp.eq.s32.totalorder %s25, 0
    %p130 = por %p128, %p129
    %p131 = scmp.ne.s32.totalorder %s119, %s120
    %p132 = scmp.eq.s32.totalorder %s26, 1
    %p133 = por %p131, %p132
    %p135 = scmp.ne.s32.totalorder %s120, %s134
    %p136 = scmp.eq.s32.totalorder %s26, 0
    %p137 = por %p135, %p136
    %s139 = sadd.s32 %s138, 1
    %p142 = scmp.eq.s32.totalorder %s20, 1
    %p143 = scmp.ne.s32.totalorder %s138, %s140
    %p144 = scmp.eq.s32.totalorder %s20, 0
    %p145 = por %p143, %p144
    %p146 = scmp.ne.s32.totalorder %s138, %s140
    %p147 = scmp.eq.s32.totalorder %s25, 1
    %p148 = por %p146, %p147
    %p149 = scmp.ne.s32.totalorder %s140, %s141
    %p150 = scmp.eq.s32.totalorder %s25, 0
    %p151 = por %p149, %p150
    %p152 = scmp.ne.s32.totalorder %s140, %s141
    %p153 = scmp.eq.s32.totalorder %s26, 1
    %p154 = por %p152, %p153
    %p156 = scmp.ne.s32.totalorder %s141, %s155
    %p157 = scmp.eq.s32.totalorder %s26, 0
    %p158 = por %p156, %p157
    %s160 = sadd.s32 %s159, 1
    %p163 = scmp.eq.s32.totalorder %s20, 1
    %p164 = scmp.ne.s32.totalorder %s159, %s161
    %p165 = scmp.eq.s32.totalorder %s20, 0
    %p166 = por %p164, %p165
    %p167 = scmp.ne.s32.totalorder %s159, %s161
    %p168 = scmp.eq.s32.totalorder %s25, 1
    %p169 = por %p167, %p168
    %p170 = scmp.ne.s32.totalorder %s161, %s162
    %p171 = scmp.eq.s32.totalorder %s25, 0
    %p172 = por %p170, %p171
    %p173 = scmp.ne.s32.totalorder %s161, %s162
    %p174 = scmp.eq.s32.totalorder %s26, 1
    %p175 = por %p173, %p174
    %p177 = scmp.ne.s32.totalorder %s162, %s176
    %p178 = scmp.eq.s32.totalorder %s26, 0
    %p179 = por %p177, %p178
    %s181 = sadd.s32 %s180, 1
    %p184 = scmp.eq.s32.totalorder %s20, 1
    %p185 = scmp.ne.s32.totalorder %s180, %s182
    %p186 = scmp.eq.s32.totalorder %s20, 0
    %p187 = por %p185, %p186
    %p188 = scmp.ne.s32.totalorder %s180, %s182
    %p189 = scmp.eq.s32.totalorder %s25, 1
    %p190 = por %p188, %p189
    %p191 = scmp.ne.s32.totalorder %s182, %s183
    %p192 = scmp.eq.s32.totalorder %s25, 0
    %p193 = por %p191, %p192
    %p194 = scmp.ne.s32.totalorder %s182, %s183
    %p195 = scmp.eq.s32.totalorder %s26, 1
    %p196 = por %p194, %p195
    %p198 = scmp.ne.s32.totalorder %s183, %s197
    %p199 = scmp.eq.s32.totalorder %s26, 0
    %p200 = por %p198, %p199
    %s202 = sadd.s32 %s201, 1
    %p205 = scmp.eq.s32.totalorder %s20, 1
    %p206 = scmp.ne.s32.totalorder %s201, %s203
    %p207 = scmp.eq.s32.totalorder %s20, 0
    %p208 = por %p206, %p207
    %p209 = scmp.ne.s32.totalorder %s201, %s203
    %p210 = scmp.eq.s32.totalorder %s25, 1
    %p211 = por %p209, %p210
    %p212 = scmp.ne.s32.totalorder %s203, %s204
    %p213 = scmp.eq.s32.totalorder %s25, 0
    %p214 = por %p212, %p213
    %p215 = scmp.ne.s32.totalorder %s203, %s204
    %p216 = scmp.eq.s32.totalorder %s26, 1
    %p217 = por %p215, %p216
    %p219 = scmp.ne.s32.totalorder %s204, %s218
    %p220 = scmp.eq.s32.totalorder %s26, 0
    %p221 = por %p219, %p220
    %s223 = sadd.s32 %s222, 1
    %p226 = scmp.eq.s32.totalorder %s20, 1
    %p227 = scmp.ne.s32.totalorder %s222, %s224
    %p228 = scmp.eq.s32.totalorder %s20, 0
    %p229 = por %p227, %p228
    %p230 = scmp.ne.s32.totalorder %s222, %s224
    %p231 = scmp.eq.s32.totalorder %s25, 1
    %p232 = por %p230, %p231
    %p233 = scmp.ne.s32.totalorder %s224, %s225
    %p234 = scmp.eq.s32.totalorder %s25, 0
    %p235 = por %p233, %p234
    %p236 = scmp.ne.s32.totalorder %s224, %s225
    %p237 = scmp.eq.s32.totalorder %s26, 1
    %p238 = por %p236, %p237
    %p240 = scmp.ne.s32.totalorder %s225, %s239
    %p241 = scmp.eq.s32.totalorder %s26, 0
    %p242 = por %p240, %p241
    %s244 = sadd.s32 %s243, 1
    %p247 = scmp.eq.s32.totalorder %s20, 1
    %p248 = scmp.ne.s32.totalorder %s243, %s245
    %p249 = scmp.eq.s32.totalorder %s20, 0
    %p250 = por %p248, %p249
    %p251 = scmp.ne.s32.totalorder %s243, %s245
    %p252 = scmp.eq.s32.totalorder %s25, 1
    %p253 = por %p251, %p252
    %p254 = scmp.ne.s32.totalorder %s245, %s246
    %p255 = scmp.eq.s32.totalorder %s25, 0
    %p256 = por %p254, %p255
    %p257 = scmp.ne.s32.totalorder %s245, %s246
    %p258 = scmp.eq.s32.totalorder %s26, 1
    %p259 = por %p257, %p258
    %p261 = scmp.ne.s32.totalorder %s246, %s260
    %p262 = scmp.eq.s32.totalorder %s26, 0
    %p263 = por %p261, %p262
    %s265 = sadd.s32 %s264, 1
    %p268 = scmp.eq.s32.totalorder %s20, 1
    %p269 = scmp.ne.s32.totalorder %s264, %s266
    %p270 = scmp.eq.s32.totalorder %s20, 0
    %p271 = por %p269, %p270
    %p272 = scmp.ne.s32.totalorder %s264, %s266
    %p273 = scmp.eq.s32.totalorder %s25, 1
    %p274 = por %p272, %p273
    %p275 = scmp.ne.s32.totalorder %s266, %s267
    %p276 = scmp.eq.s32.totalorder %s25, 0
    %p277 = por %p275, %p276
    %p278 = scmp.ne.s32.totalorder %s266, %s267
    %p279 = scmp.eq.s32.totalorder %s26, 1
    %p280 = por %p278, %p279
    %p282 = scmp.ne.s32.totalorder %s267, %s281
    %p283 = scmp.eq.s32.totalorder %s26, 0
    %p284 = por %p282, %p283
    %s286 = sadd.s32 %s285, 1
    %p289 = scmp.eq.s32.totalorder %s20, 1
    %p290 = scmp.ne.s32.totalorder %s285, %s287
    %p291 = scmp.eq.s32.totalorder %s20, 0
    %p292 = por %p290, %p291
    %p293 = scmp.ne.s32.totalorder %s285, %s287
    %p294 = scmp.eq.s32.totalorder %s25, 1
    %p295 = por %p293, %p294
    %p296 = scmp.ne.s32.totalorder %s287, %s288
    %p297 = scmp.eq.s32.totalorder %s25, 0
    %p298 = por %p296, %p297
    %p299 = scmp.ne.s32.totalorder %s287, %s288
    %p300 = scmp.eq.s32.totalorder %s26, 1
    %p301 = por %p299, %p300
    %p303 = scmp.ne.s32.totalorder %s288, %s302
    %p304 = scmp.eq.s32.totalorder %s26, 0
    %p305 = por %p303, %p304
    %s307 = sadd.s32 %s306, 1
    %p310 = scmp.eq.s32.totalorder %s20, 1
    %p311 = scmp.ne.s32.totalorder %s306, %s308
    %p312 = scmp.eq.s32.totalorder %s20, 0
    %p313 = por %p311, %p312
    %p314 = scmp.ne.s32.totalorder %s306, %s308
    %p315 = scmp.eq.s32.totalorder %s25, 1
    %p316 = por %p314, %p315
    %p317 = scmp.ne.s32.totalorder %s308, %s309
    %p318 = scmp.eq.s32.totalorder %s25, 0
    %p319 = por %p317, %p318
    %p320 = scmp.ne.s32.totalorder %s308, %s309
    %p321 = scmp.eq.s32.totalorder %s26, 1
    %p322 = por %p320, %p321
    %p324 = scmp.ne.s32.totalorder %s309, %s323
    %p325 = scmp.eq.s32.totalorder %s26, 0
    %p326 = por %p324, %p325
    %s327 = ssub.s32 %s20, %s27
    %p328 = scmp.eq.s32.totalorder %s327, 0
    %s330 = sadd.s32 %s329, 1
    %s331 = scalar_select %p328, %s329, %s330
    %p334 = pneg %p328
    %p335 = scmp.eq.s32.totalorder %s20, 1
    %p336 = por %p334, %p335
    %p337 = scmp.ne.s32.totalorder %s329, %s332
    %p338 = scmp.eq.s32.totalorder %s20, 0
    %p339 = por %p337, %p338
    %p340 = scmp.ne.s32.totalorder %s329, %s332
    %p341 = scmp.eq.s32.totalorder %s25, 1
    %p342 = por %p340, %p341
    %p343 = scmp.ne.s32.totalorder %s332, %s333
    %p344 = scmp.eq.s32.totalorder %s25, 0
    %p345 = por %p343, %p344
    %p346 = scmp.ne.s32.totalorder %s332, %s333
    %p347 = scmp.eq.s32.totalorder %s26, 1
    %p348 = por %p346, %p347
    %p350 = scmp.ne.s32.totalorder %s333, %s349
    %p351 = scmp.eq.s32.totalorder %s26, 0
    %p352 = por %p350, %p351
    %p353 = scmp.le.s32.totalorder 1, %s20
    %p354 = scmp.lt.s32.totalorder %s20, 3
    %p355 = pnand %p353, %p354
    %p356 = pneg %p355
    // Predicated region
    $region9: #{_lambda_.1} parent=5 // pred_check
      _
    $region10: #{_lambda_.1} parent=5 // pred_check_branch
      %358 = sbr.rel (%p355) target = $region12
    $region11: #{_lambda_.1} parent=5 // pred_region
      %s359 = ssub.s32 %s20, 1
      // Predicated region
      $region13: #{_lambda_.1} parent=11 // pred_check
        %p360 = pneg %p41
      $region14: #{_lambda_.1} parent=11 // pred_check_branch
        %362 = sbr.rel (%p360) target = $region16
      $region15: #{_lambda_.1} parent=11 // pred_region
        _
      $region16: #{_lambda_.1} parent=11 // pred_fallthru
        _
      // Predicated region
      $region17: #{_lambda_.1} parent=11 // pred_check
        %p363 = pneg %p88
      $region18: #{_lambda_.1} parent=11 // pred_check_branch
        %365 = sbr.rel (%p363) target = $region20
      $region19: #{_lambda_.1} parent=11 // pred_region
        _
      $region20: #{_lambda_.1} parent=11 // pred_fallthru
        _
      // Predicated region
      $region21: #{_lambda_.1} parent=11 // pred_check
        %p366 = pneg %p109
      $region22: #{_lambda_.1} parent=11 // pred_check_branch
        %368 = sbr.rel (%p366) target = $region24
      $region23: #{_lambda_.1} parent=11 // pred_region
        _
      $region24: #{_lambda_.1} parent=11 // pred_fallthru
        _
      // Predicated region
      $region25: #{_lambda_.1} parent=11 // pred_check
        %p369 = pneg %p130
      $region26: #{_lambda_.1} parent=11 // pred_check_branch
        %371 = sbr.rel (%p369) target = $region28
      $region27: #{_lambda_.1} parent=11 // pred_region
        _
      $region28: #{_lambda_.1} parent=11 // pred_fallthru
        _
      // Predicated region
      $region29: #{_lambda_.1} parent=11 // pred_check
        %p372 = pneg %p151
      $region30: #{_lambda_.1} parent=11 // pred_check_branch
        %374 = sbr.rel (%p372) target = $region32
      $region31: #{_lambda_.1} parent=11 // pred_region
        _
      $region32: #{_lambda_.1} parent=11 // pred_fallthru
        _
      // Predicated region
      $region33: #{_lambda_.1} parent=11 // pred_check
        %p375 = pneg %p172
      $region34: #{_lambda_.1} parent=11 // pred_check_branch
        %377 = sbr.rel (%p375) target = $region36
      $region35: #{_lambda_.1} parent=11 // pred_region
        _
      $region36: #{_lambda_.1} parent=11 // pred_fallthru
        _
      // Predicated region
      $region37: #{_lambda_.1} parent=11 // pred_check
        %p378 = pneg %p193
      $region38: #{_lambda_.1} parent=11 // pred_check_branch
        %380 = sbr.rel (%p378) target = $region40
      $region39: #{_lambda_.1} parent=11 // pred_region
        _
      $region40: #{_lambda_.1} parent=11 // pred_fallthru
        _
      // Predicated region
      $region41: #{_lambda_.1} parent=11 // pred_check
        %p381 = pneg %p214
      $region42: #{_lambda_.1} parent=11 // pred_check_branch
        %383 = sbr.rel (%p381) target = $region44
      $region43: #{_lambda_.1} parent=11 // pred_region
        _
      $region44: #{_lambda_.1} parent=11 // pred_fallthru
        _
      // Predicated region
      $region45: #{_lambda_.1} parent=11 // pred_check
        %p384 = pneg %p235
      $region46: #{_lambda_.1} parent=11 // pred_check_branch
        %386 = sbr.rel (%p384) target = $region48
      $region47: #{_lambda_.1} parent=11 // pred_region
        _
      $region48: #{_lambda_.1} parent=11 // pred_fallthru
        _
      // Predicated region
      $region49: #{_lambda_.1} parent=11 // pred_check
        %p387 = pneg %p256
      $region50: #{_lambda_.1} parent=11 // pred_check_branch
        %389 = sbr.rel (%p387) target = $region52
      $region51: #{_lambda_.1} parent=11 // pred_region
        _
      $region52: #{_lambda_.1} parent=11 // pred_fallthru
        _
      // Predicated region
      $region53: #{_lambda_.1} parent=11 // pred_check
        %p390 = pneg %p277
      $region54: #{_lambda_.1} parent=11 // pred_check_branch
        %392 = sbr.rel (%p390) target = $region56
      $region55: #{_lambda_.1} parent=11 // pred_region
        _
      $region56: #{_lambda_.1} parent=11 // pred_fallthru
        _
      // Predicated region
      $region57: #{_lambda_.1} parent=11 // pred_check
        %p393 = pneg %p298
      $region58: #{_lambda_.1} parent=11 // pred_check_branch
        %395 = sbr.rel (%p393) target = $region60
      $region59: #{_lambda_.1} parent=11 // pred_region
        _
      $region60: #{_lambda_.1} parent=11 // pred_fallthru
        _
      // Predicated region
      $region61: #{_lambda_.1} parent=11 // pred_check
        %p396 = pneg %p319
      $region62: #{_lambda_.1} parent=11 // pred_check_branch
        %398 = sbr.rel (%p396) target = $region64
      $region63: #{_lambda_.1} parent=11 // pred_region
        _
      $region64: #{_lambda_.1} parent=11 // pred_fallthru
        _
    $region12: #{_lambda_.1} parent=5 // pred_fallthru
      _
    %p399 = scmp.lt.s32.totalorder %s20, 2
    // Predicated region
    $region65: #{_lambda_.1} parent=5 // pred_check
      %p400 = pneg %p399
    $region66: #{_lambda_.1} parent=5 // pred_check_branch
      %402 = sbr.rel (%p400) target = $region68
    $region67: #{_lambda_.1} parent=5 // pred_region
      // Predicated region
      $region69: #{_lambda_.1} parent=67 // pred_check
        %p403 = pneg %p61
      $region70: #{_lambda_.1} parent=67 // pred_check_branch
        %405 = sbr.rel (%p403) target = $region72
      $region71: #{_lambda_.1} parent=67 // pred_region
        %p406 = scmp.lt.s32.totalorder %s20, 1
        %s407 = scalar_select %p406, %s20, 1
        %s408 = smul.addr %s407, 2
        %s409 = smul.addr %s408, 8
        %s410 = scalar_lea.vmem %s1, %s409
      $region72: #{_lambda_.1} parent=67 // pred_fallthru
        _
    $region68: #{_lambda_.1} parent=5 // pred_fallthru
      _
    %p411 = scmp.le.s32.totalorder 1, %s20
    %p412 = scmp.lt.s32.totalorder %s20, 3
    %p413 = pnand %p411, %p412
    %p414 = pneg %p413
    // Predicated region
    $region73: #{_lambda_.1} parent=5 // pred_check
      _
    $region74: #{_lambda_.1} parent=5 // pred_check_branch
      %416 = sbr.rel (%p413) target = $region76
    $region75: #{_lambda_.1} parent=5 // pred_region
      %s417 = ssub.s32 %s20, 1
      %p418 = pneg %p41
      %p419 = pneg %p38
      %p420 = scmp.lt.s32.totalorder %s25, 1
      %s421 = scalar_select %p420, %s25, 1
      %s422 = smul.addr %s421, 2
      %s423 = smul.addr %s422, 8
      %s424 = scalar_lea.vmem %s1, %s423
      %p425 = pneg %p67
      %p426 = pneg %p64
      %p427 = pneg %p88
      %p428 = pneg %p85
      %p429 = pneg %p109
      %p430 = pneg %p106
      %p431 = pneg %p130
      %p432 = pneg %p127
      %p433 = pneg %p151
      %p434 = pneg %p148
      %p435 = pneg %p172
      %p436 = pneg %p169
      %p437 = pneg %p193
      %p438 = pneg %p190
      %p439 = pneg %p214
      %p440 = pneg %p211
      %p441 = pneg %p235
      %p442 = pneg %p232
      %p443 = pneg %p256
      %p444 = pneg %p253
      %p445 = pneg %p277
      %p446 = pneg %p274
      %p447 = pneg %p298
      %p448 = pneg %p295
      %p449 = pneg %p319
      %p450 = pneg %p316
      %p451 = pneg %p345
      %p452 = pneg %p342
      %p453 = scmp.lt.s32.totalorder %s25, 1
      %s454 = scalar_select %p453, %s25, 1
      %s455 = smul.addr %s454, 4
      %s456 = smul.addr %s455, 8
      %s457 = scalar_lea.vmem %s14, %s456
      %p458 = scmp.lt.s32.totalorder %s25, 1
      %s459 = scalar_select %p458, %s25, 1
      %s460 = smul.addr %s459, 2
      %s461 = smul.addr %s460, 8
      %s462 = scalar_lea.vmem %s1, %s461
      %p463 = scmp.lt.s32.totalorder %s25, 1
      %s464 = scalar_select %p463, %s25, 1
      %s465 = smul.addr %s464, 4
      %s466 = smul.addr %s465, 8
      %s467 = scalar_lea.vmem %s14, %s466
      %v469 = vld [vmem:[%s0] ss:$8 sm:$0x3]
      %s470 = scalar_lea.vmem %s0, 1
      %v471 = vld [vmem:[%s470] ss:$8 sm:$0x3]
      %s472 = scalar_lea.vmem %s0, 2
      %v473 = vld [vmem:[%s472] ss:$8 sm:$0x3]
      %s474 = scalar_lea.vmem %s0, 3
      %v475 = vld [vmem:[%s474] ss:$8 sm:$0x3]
      %s476 = scalar_lea.vmem %s0, 5
      %v477 = vld [vmem:[%s476] ss:$8 sm:$0x3]
      %s478 = scalar_lea.vmem %s0, 6
      %v479 = vld [vmem:[%s478] ss:$8 sm:$0x3]
      %s480 = scalar_lea.vmem %s0, 7
      %v481 = vld [vmem:[%s480] ss:$8 sm:$0x3]
      %s482 = scalar_lea.vmem %s0, 16
      %v483 = vld [vmem:[%s482] ss:$8 sm:$0x3]
      %v484 = vld [vmem:[%s462] sm:$0xff]
      %v485 = vld [vmem:[%s462 + $0x8] sm:$0xff]
      %486 = vrot.lane.b32.xlu0 %v484, 17
      %v487 = vpop.permute.xlu0 %486
      %488 = vrot.lane.b32.xlu0 %v485, 17
      %v489 = vpop.permute.xlu0 %488
      %v490 = vlaneseq
      %v491 = vand.u32 %v490, 127
      %vm492 = vcmp.lt.s32.totalorder %v491, 17
      %v493 = vsel %vm492, %v487, %v489
      %v494 = vsel %vm492, %v489, %v487
      %v496 = vlaneseq
      %v497 = vshrl.u32 %v496, 7
      %v498 = vsub.s32 0, %v497
      %v499 = vrot.slane %v469, %v498
      %v500 = vlaneseq
      %v501 = vshrl.u32 %v500, 7
      %v502 = vsub.s32 1, %v501
      %v503 = vrot.slane %v469, %v502
      %v506 = vmul.f32 %v494, %v499
      %v507 = vmul.f32 %v493, %v503
      %508 = vrot.lane.b32.xlu0 %v484, 16
      %v509 = vpop.permute.xlu0 %508
      %510 = vrot.lane.b32.xlu0 %v485, 16
      %v511 = vpop.permute.xlu0 %510
      %vm512 = vcmp.lt.s32.totalorder %v491, 16
      %v513 = vsel %vm512, %v509, %v511
      %v514 = vsel %vm512, %v511, %v509
      %v516 = vlaneseq
      %v517 = vshrl.u32 %v516, 7
      %v518 = vsub.s32 0, %v517
      %v519 = vrot.slane %v471, %v518
      %v520 = vlaneseq
      %v521 = vshrl.u32 %v520, 7
      %v522 = vsub.s32 1, %v521
      %v523 = vrot.slane %v471, %v522
      %v526 = vmul.f32 %v514, %v519
      %v527 = vmul.f32 %v513, %v523
      %528 = vrot.lane.b32.xlu0 %v484, 15
      %v529 = vpop.permute.xlu0 %528
      %530 = vrot.lane.b32.xlu0 %v485, 15
      %v531 = vpop.permute.xlu0 %530
      %vm532 = vcmp.lt.s32.totalorder %v491, 15
      %v533 = vsel %vm532, %v529, %v531
      %v534 = vsel %vm532, %v531, %v529
      %v536 = vlaneseq
      %v537 = vshrl.u32 %v536, 7
      %v538 = vsub.s32 0, %v537
      %v539 = vrot.slane %v473, %v538
      %v540 = vlaneseq
      %v541 = vshrl.u32 %v540, 7
      %v542 = vsub.s32 1, %v541
      %v543 = vrot.slane %v473, %v542
      %v546 = vmul.f32 %v534, %v539
      %v547 = vmul.f32 %v533, %v543
      %548 = vrot.lane.b32.xlu0 %v484, 1
      %v549 = vpop.permute.xlu0 %548
      %550 = vrot.lane.b32.xlu0 %v485, 1
      %v551 = vpop.permute.xlu0 %550
      %vm552 = vcmp.lt.s32.totalorder %v491, 1
      %v553 = vsel %vm552, %v549, %v551
      %v554 = vsel %vm552, %v551, %v549
      %v556 = vlaneseq
      %v557 = vshrl.u32 %v556, 7
      %v558 = vsub.s32 0, %v557
      %v559 = vrot.slane %v475, %v558
      %v560 = vlaneseq
      %v561 = vshrl.u32 %v560, 7
      %v562 = vsub.s32 1, %v561
      %v563 = vrot.slane %v475, %v562
      %v566 = vmul.f32 %v554, %v559
      %v567 = vmul.f32 %v553, %v563
      %568 = vrot.lane.b32.xlu0 %v484, 127
      %v569 = vpop.permute.xlu0 %568
      %570 = vrot.lane.b32.xlu0 %v485, 127
      %v571 = vpop.permute.xlu0 %570
      %vm572 = vcmp.lt.s32.totalorder %v491, 127
      %v573 = vsel %vm572, %v569, %v571
      %v574 = vsel %vm572, %v571, %v569
      %v576 = vlaneseq
      %v577 = vshrl.u32 %v576, 7
      %v578 = vsub.s32 0, %v577
      %v579 = vrot.slane %v477, %v578
      %v580 = vlaneseq
      %v581 = vshrl.u32 %v580, 7
      %v582 = vsub.s32 1, %v581
      %v583 = vrot.slane %v477, %v582
      %v586 = vmul.f32 %v573, %v579
      %v587 = vmul.f32 %v574, %v583
      %588 = vrot.lane.b32.xlu0 %v484, 113
      %v589 = vpop.permute.xlu0 %588
      %590 = vrot.lane.b32.xlu0 %v485, 113
      %v591 = vpop.permute.xlu0 %590
      %vm592 = vcmp.lt.s32.totalorder %v491, 113
      %v593 = vsel %vm592, %v589, %v591
      %v594 = vsel %vm592, %v591, %v589
      %v596 = vlaneseq
      %v597 = vshrl.u32 %v596, 7
      %v598 = vsub.s32 0, %v597
      %v599 = vrot.slane %v479, %v598
      %v600 = vlaneseq
      %v601 = vshrl.u32 %v600, 7
      %v602 = vsub.s32 1, %v601
      %v603 = vrot.slane %v479, %v602
      %v606 = vmul.f32 %v593, %v599
      %v607 = vmul.f32 %v594, %v603
      %608 = vrot.lane.b32.xlu0 %v484, 112
      %v609 = vpop.permute.xlu0 %608
      %610 = vrot.lane.b32.xlu0 %v485, 112
      %v611 = vpop.permute.xlu0 %610
      %vm612 = vcmp.lt.s32.totalorder %v491, 112
      %v613 = vsel %vm612, %v609, %v611
      %v614 = vsel %vm612, %v611, %v609
      %v616 = vlaneseq
      %v617 = vshrl.u32 %v616, 7
      %v618 = vsub.s32 0, %v617
      %v619 = vrot.slane %v481, %v618
      %v620 = vlaneseq
      %v621 = vshrl.u32 %v620, 7
      %v622 = vsub.s32 1, %v621
      %v623 = vrot.slane %v481, %v622
      %v626 = vmul.f32 %v613, %v619
      %v627 = vmul.f32 %v614, %v623
      %628 = vrot.lane.b32.xlu0 %v484, 111
      %v629 = vpop.permute.xlu0 %628
      %630 = vrot.lane.b32.xlu0 %v485, 111
      %v631 = vpop.permute.xlu0 %630
      %vm632 = vcmp.lt.s32.totalorder %v491, 111
      %v633 = vsel %vm632, %v629, %v631
      %v634 = vsel %vm632, %v631, %v629
      %v636 = vlaneseq
      %v637 = vshrl.u32 %v636, 7
      %v638 = vsub.s32 0, %v637
      %v639 = vrot.slane %v483, %v638
      %v640 = vlaneseq
      %v641 = vshrl.u32 %v640, 7
      %v642 = vsub.s32 1, %v641
      %v643 = vrot.slane %v483, %v642
      %v646 = vmul.f32 %v633, %v639
      %v647 = vmul.f32 %v634, %v643
      %v648 = vpack.c.bf16 %v526, %v506
      %v649 = vpack.c.bf16 %v527, %v507
      %v650 = vpack.c.bf16 %v566, %v546
      %v651 = vpack.c.bf16 %v567, %v547
      %v652 = vpack.c.bf16 %v586, %v484
      %v653 = vpack.c.bf16 %v587, %v485
      %v654 = vpack.c.bf16 %v626, %v606
      %v655 = vpack.c.bf16 %v627, %v607
      %v656 = vpack.c.bf16 %v646, %v646
      %v657 = vpack.c.bf16 %v647, %v647
      %v658 = vld [vmem:[%s2] sm:$0xf]
      %v659 = vld [vmem:[%s2 + $0x4] sm:$0xf]
      %v660 = vld [vmem:[%s3] sm:$0xff]
      %v661 = vld [vmem:[%s3 + $0x8] sm:$0xff]
      %663 = vset.pattern.permute.xlu0 0
      %664 = vperm.xlu0 %663, %v660
      %v665 = vpop.permute.xlu0 %664
      %668 = vset.pattern.permute.xlu0 0
      %669 = vperm.xlu0 %668, %v661
      %v670 = vpop.permute.xlu0 %669
      %v674 = vunpack.c.l.b16 %v658
      %v675 = vunpack.c.l.b16 %v659
      %v676 = vpack.c.b16 %v675, %v674
      %vm677 = vcmask 588800
      %v679 = vsel %vm677, %v676, 0
      %vm681 = vcmask 1043456
      %v683 = vsel %vm681, %v656, 0
      %v686 = vsel %vm681, %v657, 0
      %688 = vmatprep.subr.bf16.mxu0 %v649
      %689 = vmatpush1.bf16.msra.mxu0 %v648
      %690 = vmatprep.subr.bf16.mxu0 %v651
      %691 = vmatpush1.bf16.msra.mxu0 %v650
      %692 = vmatprep.subr.bf16.mxu0 %v653
      %693 = vmatpush1.bf16.msra.mxu0 %v652
      %694 = vmatprep.subr.bf16.mxu0 %v655
      %695 = vmatpush1.bf16.msra.mxu0 %v654
      %696 = vmatprep.subr.bf16.mxu0 %v686
      %697 = vmatpush1.bf16.msra.mxu0 %v683
      %698 = vmatprep.subr.bf16.mxu0 0
      %699 = vmatpush1.bf16.msra.mxu0 0
      %700 = vmatprep.subr.bf16.mxu0 0
      %701 = vmatpush1.bf16.msra.mxu0 0
      %702 = vmatprep.subr.bf16.mxu0 0
      %703 = vmatpush1.bf16.msra.mxu0 0
      %704 = vmatprep.subr.bf16.mxu0 0
      %705 = vmatpush1.bf16.msra.mxu0 0
      %706 = vmatprep.subr.bf16.mxu0 0
      %707 = vmatpush1.bf16.msra.mxu0 0
      %708 = vmatprep.subr.bf16.mxu0 0
      %709 = vmatpush1.bf16.msra.mxu0 0
      %710 = vmatprep.subr.bf16.mxu0 0
      %711 = vmatpush1.bf16.msra.mxu0 0
      %712 = vmatprep.subr.bf16.mxu0 0
      %713 = vmatpush1.bf16.msra.mxu0 0
      %714 = vmatprep.subr.bf16.mxu0 0
      %715 = vmatpush1.bf16.msra.mxu0 0
      %716 = vmatprep.subr.bf16.mxu0 0
      %717 = vmatpush1.bf16.msra.mxu0 0
      %718 = vmatprep.subr.bf16.mxu0 0
      %719 = vmatpush1.bf16.msra.mxu0 0
      %720 = vmatprep.mubr.bf16.mxu0 0
      %721 = vmatmul.mubr.bf16.gmra.mrb[0].mxu0 %v679
      %v722 = vpop.f32.mrb[0].mxu0
      %v723 = vadd.f32 %v665, %v722
      %v724 = vpop.f32.mrb[0].mxu0
      %v725 = vadd.f32 %v665, %v724
      %v726 = vpop.f32.mrb[0].mxu0
      %v727 = vadd.f32 %v670, %v726
      %v728 = vpop.f32.mrb[0].mxu0
      %v729 = vadd.f32 %v670, %v728
      %730 = vdwg.mxu0
      %v731 = vmax.f32 %v723, 0.0
      %v732 = vmax.f32 %v725, 0.0
      %v733 = vmax.f32 %v727, 0.0
      %v734 = vmax.f32 %v729, 0.0
      %735 = vrot.lane.b32.xlu0 %v731, 17
      %v736 = vpop.permute.xlu0 %735
      %737 = vrot.lane.b32.xlu0 %v733, 17
      %v738 = vpop.permute.xlu0 %737
      %739 = vrot.lane.b32.xlu0 %v732, 17
      %v740 = vpop.permute.xlu0 %739
      %741 = vrot.lane.b32.xlu0 %v734, 17
      %v742 = vpop.permute.xlu0 %741
      %v743 = vsel %vm492, %v736, %v740
      %v744 = vsel %vm492, %v738, %v742
      %v745 = vsel %vm492, %v740, %v736
      %v746 = vsel %vm492, %v742, %v738
      %v747 = vmul.f32 %v745, %v499
      %v748 = vmul.f32 %v743, %v503
      %v749 = vmul.f32 %v746, %v499
      %v750 = vmul.f32 %v744, %v503
      %751 = vrot.lane.b32.xlu0 %v731, 16
      %v752 = vpop.permute.xlu0 %751
      %753 = vrot.lane.b32.xlu0 %v733, 16
      %v754 = vpop.permute.xlu0 %753
      %755 = vrot.lane.b32.xlu0 %v732, 16
      %v756 = vpop.permute.xlu0 %755
      %757 = vrot.lane.b32.xlu0 %v734, 16
      %v758 = vpop.permute.xlu0 %757
      %v759 = vsel %vm512, %v752, %v756
      %v760 = vsel %vm512, %v754, %v758
      %v761 = vsel %vm512, %v756, %v752
      %v762 = vsel %vm512, %v758, %v754
      %v763 = vmul.f32 %v761, %v519
      %v764 = vmul.f32 %v759, %v523
      %v765 = vmul.f32 %v762, %v519
      %v766 = vmul.f32 %v760, %v523
      %767 = vrot.lane.b32.xlu0 %v731, 15
      %v768 = vpop.permute.xlu0 %767
      %769 = vrot.lane.b32.xlu0 %v733, 15
      %v770 = vpop.permute.xlu0 %769
      %771 = vrot.lane.b32.xlu0 %v732, 15
      %v772 = vpop.permute.xlu0 %771
      %773 = vrot.lane.b32.xlu0 %v734, 15
      %v774 = vpop.permute.xlu0 %773
      %v775 = vsel %vm532, %v768, %v772
      %v776 = vsel %vm532, %v770, %v774
      %v777 = vsel %vm532, %v772, %v768
      %v778 = vsel %vm532, %v774, %v770
      %v779 = vmul.f32 %v777, %v539
      %v780 = vmul.f32 %v775, %v543
      %v781 = vmul.f32 %v778, %v539
      %v782 = vmul.f32 %v776, %v543
      %783 = vrot.lane.b32.xlu0 %v731, 1
      %v784 = vpop.permute.xlu0 %783
      %785 = vrot.lane.b32.xlu0 %v733, 1
      %v786 = vpop.permute.xlu0 %785
      %787 = vrot.lane.b32.xlu0 %v732, 1
      %v788 = vpop.permute.xlu0 %787
      %789 = vrot.lane.b32.xlu0 %v734, 1
      %v790 = vpop.permute.xlu0 %789
      %v791 = vsel %vm552, %v784, %v788
      %v792 = vsel %vm552, %v786, %v790
      %v793 = vsel %vm552, %v788, %v784
      %v794 = vsel %vm552, %v790, %v786
      %v795 = vmul.f32 %v793, %v559
      %v796 = vmul.f32 %v791, %v563
      %v797 = vmul.f32 %v794, %v559
      %v798 = vmul.f32 %v792, %v563
      %799 = vrot.lane.b32.xlu0 %v731, 127
      %v800 = vpop.permute.xlu0 %799
      %801 = vrot.lane.b32.xlu0 %v733, 127
      %v802 = vpop.permute.xlu0 %801
      %803 = vrot.lane.b32.xlu0 %v732, 127
      %v804 = vpop.permute.xlu0 %803
      %805 = vrot.lane.b32.xlu0 %v734, 127
      %v806 = vpop.permute.xlu0 %805
      %v807 = vsel %vm572, %v800, %v804
      %v808 = vsel %vm572, %v802, %v806
      %v809 = vsel %vm572, %v804, %v800
      %v810 = vsel %vm572, %v806, %v802
      %v811 = vmul.f32 %v807, %v579
      %v812 = vmul.f32 %v809, %v583
      %v813 = vmul.f32 %v808, %v579
      %v814 = vmul.f32 %v810, %v583
      %815 = vrot.lane.b32.xlu0 %v731, 113
      %v816 = vpop.permute.xlu0 %815
      %817 = vrot.lane.b32.xlu0 %v733, 113
      %v818 = vpop.permute.xlu0 %817
      %819 = vrot.lane.b32.xlu0 %v732, 113
      %v820 = vpop.permute.xlu0 %819
      %821 = vrot.lane.b32.xlu0 %v734, 113
      %v822 = vpop.permute.xlu0 %821
      %v823 = vsel %vm592, %v816, %v820
      %v824 = vsel %vm592, %v818, %v822
      %v825 = vsel %vm592, %v820, %v816
      %v826 = vsel %vm592, %v822, %v818
      %v827 = vmul.f32 %v823, %v599
      %v828 = vmul.f32 %v825, %v603
      %v829 = vmul.f32 %v824, %v599
      %v830 = vmul.f32 %v826, %v603
      %831 = vrot.lane.b32.xlu0 %v731, 112
      %v832 = vpop.permute.xlu0 %831
      %833 = vrot.lane.b32.xlu0 %v733, 112
      %v834 = vpop.permute.xlu0 %833
      %835 = vrot.lane.b32.xlu0 %v732, 112
      %v836 = vpop.permute.xlu0 %835
      %837 = vrot.lane.b32.xlu0 %v734, 112
      %v838 = vpop.permute.xlu0 %837
      %v839 = vsel %vm612, %v832, %v836
      %v840 = vsel %vm612, %v834, %v838
      %v841 = vsel %vm612, %v836, %v832
      %v842 = vsel %vm612, %v838, %v834
      %v843 = vmul.f32 %v839, %v619
      %v844 = vmul.f32 %v841, %v623
      %v845 = vmul.f32 %v840, %v619
      %v846 = vmul.f32 %v842, %v623
      %847 = vrot.lane.b32.xlu0 %v731, 111
      %v848 = vpop.permute.xlu0 %847
      %849 = vrot.lane.b32.xlu0 %v733, 111
      %v850 = vpop.permute.xlu0 %849
      %851 = vrot.lane.b32.xlu0 %v732, 111
      %v852 = vpop.permute.xlu0 %851
      %853 = vrot.lane.b32.xlu0 %v734, 111
      %v854 = vpop.permute.xlu0 %853
      %v855 = vsel %vm632, %v848, %v852
      %v856 = vsel %vm632, %v850, %v854
      %v857 = vsel %vm632, %v852, %v848
      %v858 = vsel %vm632, %v854, %v850
      %v859 = vmul.f32 %v855, %v639
      %v860 = vmul.f32 %v857, %v643
      %v861 = vmul.f32 %v856, %v639
      %v862 = vmul.f32 %v858, %v643
      %v863 = vpack.c.bf16 %v749, %v747
      %v864 = vpack.c.bf16 %v750, %v748
      %v865 = vpack.c.bf16 %v765, %v763
      %v866 = vpack.c.bf16 %v766, %v764
      %v867 = vpack.c.bf16 %v781, %v779
      %v868 = vpack.c.bf16 %v782, %v780
      %v869 = vpack.c.bf16 %v797, %v795
      %v870 = vpack.c.bf16 %v798, %v796
      %v871 = vpack.c.bf16 %v733, %v731
      %v872 = vpack.c.bf16 %v734, %v732
      %v873 = vpack.c.bf16 %v813, %v811
      %v874 = vpack.c.bf16 %v814, %v812
      %v875 = vpack.c.bf16 %v829, %v827
      %v876 = vpack.c.bf16 %v830, %v828
      %v877 = vpack.c.bf16 %v845, %v843
      %v878 = vpack.c.bf16 %v846, %v844
      %v879 = vpack.c.bf16 %v861, %v859
      %v880 = vpack.c.bf16 %v862, %v860
      %v881 = vld [vmem:[%s4] sm:$0xff]
      %v882 = vld [vmem:[%s4 + $0x8] sm:$0xff]
      %v883 = vld [vmem:[%s5] sm:$0xff]
      %v884 = vld [vmem:[%s5 + $0x8] sm:$0xff]
      %886 = vset.pattern.permute.xlu0 0
      %887 = vperm.xlu0 %886, %v883
      %v888 = vpop.permute.xlu0 %887
      %891 = vset.pattern.permute.xlu0 0
      %892 = vperm.xlu0 %891, %v884
      %v893 = vpop.permute.xlu0 %892
      %v897 = vunpack.c.l.b16 %v881
      %v898 = vunpack.c.h.b16 %v881
      %v899 = vunpack.c.l.b16 %v882
      %v900 = vunpack.c.h.b16 %v882
      %v901 = vpack.c.b16 %v899, %v897
      %v902 = vpack.c.b16 %v900, %v898
      %vm904 = vcmask 130048
      %v906 = vsel %vm904, %v902, 0
      %908 = vmatprep.subr.bf16.mxu0 %v864
      %909 = vmatpush1.bf16.msra.mxu0 %v863
      %910 = vmatprep.subr.bf16.mxu0 %v866
      %911 = vmatpush1.bf16.msra.mxu0 %v865
      %912 = vmatprep.subr.bf16.mxu0 %v868
      %913 = vmatpush1.bf16.msra.mxu0 %v867
      %914 = vmatprep.subr.bf16.mxu0 %v870
      %915 = vmatpush1.bf16.msra.mxu0 %v869
      %916 = vmatprep.subr.bf16.mxu0 %v872
      %917 = vmatpush1.bf16.msra.mxu0 %v871
      %918 = vmatprep.subr.bf16.mxu0 %v874
      %919 = vmatpush1.bf16.msra.mxu0 %v873
      %920 = vmatprep.subr.bf16.mxu0 %v876
      %921 = vmatpush1.bf16.msra.mxu0 %v875
      %922 = vmatprep.subr.bf16.mxu0 %v878
      %923 = vmatpush1.bf16.msra.mxu0 %v877
      %924 = vmatprep.subr.bf16.mxu0 %v880
      %925 = vmatpush1.bf16.msra.mxu0 %v879
      %926 = vmatprep.subr.bf16.mxu0 0
      %927 = vmatpush1.bf16.msra.mxu0 0
      %928 = vmatprep.subr.bf16.mxu0 0
      %929 = vmatpush1.bf16.msra.mxu0 0
      %930 = vmatprep.subr.bf16.mxu0 0
      %931 = vmatpush1.bf16.msra.mxu0 0
      %932 = vmatprep.subr.bf16.mxu0 0
      %933 = vmatpush1.bf16.msra.mxu0 0
      %934 = vmatprep.subr.bf16.mxu0 0
      %935 = vmatpush1.bf16.msra.mxu0 0
      %936 = vmatprep.subr.bf16.mxu0 0
      %937 = vmatpush1.bf16.msra.mxu0 0
      %938 = vmatprep.subr.bf16.mxu0 0
      %939 = vmatpush1.bf16.msra.mxu0 0
      %940 = vmatprep.mubr.bf16.mxu0 %v906
      %941 = vmatmul.mubr.bf16.gmra.mrb[0].mxu0 %v901
      %v942 = vpop.f32.mrb[0].mxu0
      %v943 = vadd.f32 %v888, %v942
      %v944 = vpop.f32.mrb[0].mxu0
      %v945 = vadd.f32 %v888, %v944
      %v946 = vpop.f32.mrb[0].mxu0
      %v947 = vadd.f32 %v893, %v946
      %v948 = vpop.f32.mrb[0].mxu0
      %v949 = vadd.f32 %v893, %v948
      %950 = vdwg.mxu0
      %v951 = vmax.f32 %v943, 0.0
      %v952 = vmax.f32 %v945, 0.0
      %v953 = vmax.f32 %v947, 0.0
      %v954 = vmax.f32 %v949, 0.0
      %v955 = vpack.c.bf16 %v953, %v951
      %v956 = vpack.c.bf16 %v954, %v952
      %v957 = vld [vmem:[%s6] sm:$0xf]
      %v958 = vld [vmem:[%s6 + $0x4] sm:$0xf]
      %v959 = vld [vmem:[%s7] sm:$0xff]
      %v960 = vld [vmem:[%s7 + $0x8] sm:$0xff]
      %962 = vset.pattern.permute.xlu0 0
      %963 = vperm.xlu0 %962, %v959
      %v964 = vpop.permute.xlu0 %963
      %967 = vset.pattern.permute.xlu0 0
      %968 = vperm.xlu0 %967, %v960
      %v969 = vpop.permute.xlu0 %968
      %v973 = vunpack.c.l.b16 %v957
      %v974 = vunpack.c.l.b16 %v958
      %v975 = vpack.c.b16 %v974, %v973
      %vm976 = vcmask 261120
      %v978 = vsel %vm976, %v975, 0
      %980 = vmatprep.subr.bf16.mxu0 %v872
      %981 = vmatpush1.bf16.msra.mxu0 %v871
      %982 = vmatprep.subr.bf16.mxu0 %v956
      %983 = vmatpush1.bf16.msra.mxu0 %v955
      %984 = vmatprep.subr.bf16.mxu0 0
      %985 = vmatpush1.bf16.msra.mxu0 0
      %986 = vmatprep.subr.bf16.mxu0 0
      %987 = vmatpush1.bf16.msra.mxu0 0
      %988 = vmatprep.subr.bf16.mxu0 0
      %989 = vmatpush1.bf16.msra.mxu0 0
      %990 = vmatprep.subr.bf16.mxu0 0
      %991 = vmatpush1.bf16.msra.mxu0 0
      %992 = vmatprep.subr.bf16.mxu0 0
      %993 = vmatpush1.bf16.msra.mxu0 0
      %994 = vmatprep.subr.bf16.mxu0 0
      %995 = vmatpush1.bf16.msra.mxu0 0
      %996 = vmatprep.subr.bf16.mxu0 0
      %997 = vmatpush1.bf16.msra.mxu0 0
      %998 = vmatprep.subr.bf16.mxu0 0
      %999 = vmatpush1.bf16.msra.mxu0 0
      %1000 = vmatprep.subr.bf16.mxu0 0
      %1001 = vmatpush1.bf16.msra.mxu0 0
      %1002 = vmatprep.subr.bf16.mxu0 0
      %1003 = vmatpush1.bf16.msra.mxu0 0
      %1004 = vmatprep.subr.bf16.mxu0 0
      %1005 = vmatpush1.bf16.msra.mxu0 0
      %1006 = vmatprep.subr.bf16.mxu0 0
      %1007 = vmatpush1.bf16.msra.mxu0 0
      %1008 = vmatprep.subr.bf16.mxu0 0
      %1009 = vmatpush1.bf16.msra.mxu0 0
      %1010 = vmatprep.subr.bf16.mxu0 0
      %1011 = vmatpush1.bf16.msra.mxu0 0
      %1012 = vmatprep.mubr.bf16.mxu0 0
      %1013 = vmatmul.mubr.bf16.gmra.mrb[0].mxu0 %v978
      %v1014 = vpop.f32.mrb[0].mxu0
      %v1015 = vadd.f32 %v964, %v1014
      %v1016 = vpop.f32.mrb[0].mxu0
      %v1017 = vadd.f32 %v964, %v1016
      %v1018 = vpop.f32.mrb[0].mxu0
      %v1019 = vadd.f32 %v969, %v1018
      %v1020 = vpop.f32.mrb[0].mxu0
      %v1021 = vadd.f32 %v969, %v1020
      %1022 = vdwg.mxu0
      %1023 = vrot.lane.b32.xlu0 %v1015, 17
      %v1024 = vpop.permute.xlu0 %1023
      %1025 = vrot.lane.b32.xlu0 %v1019, 17
      %v1026 = vpop.permute.xlu0 %1025
      %1027 = vrot.lane.b32.xlu0 %v1017, 17
      %v1028 = vpop.permute.xlu0 %1027
      %1029 = vrot.lane.b32.xlu0 %v1021, 17
      %v1030 = vpop.permute.xlu0 %1029
      %v1031 = vsel %vm492, %v1024, %v1028
      %v1032 = vsel %vm492, %v1026, %v1030
      %v1033 = vsel %vm492, %v1028, %v1024
      %v1034 = vsel %vm492, %v1030, %v1026
      %v1035 = vmul.f32 %v1033, %v499
      %v1036 = vmul.f32 %v1031, %v503
      %v1037 = vmul.f32 %v1034, %v499
      %v1038 = vmul.f32 %v1032, %v503
      %1039 = vrot.lane.b32.xlu0 %v1015, 16
      %v1040 = vpop.permute.xlu0 %1039
      %1041 = vrot.lane.b32.xlu0 %v1019, 16
      %v1042 = vpop.permute.xlu0 %1041
      %1043 = vrot.lane.b32.xlu0 %v1017, 16
      %v1044 = vpop.permute.xlu0 %1043
      %1045 = vrot.lane.b32.xlu0 %v1021, 16
      %v1046 = vpop.permute.xlu0 %1045
      %v1047 = vsel %vm512, %v1040, %v1044
      %v1048 = vsel %vm512, %v1042, %v1046
      %v1049 = vsel %vm512, %v1044, %v1040
      %v1050 = vsel %vm512, %v1046, %v1042
      %v1051 = vmul.f32 %v1049, %v519
      %v1052 = vmul.f32 %v1047, %v523
      %v1053 = vmul.f32 %v1050, %v519
      %v1054 = vmul.f32 %v1048, %v523
      %1055 = vrot.lane.b32.xlu0 %v1015, 15
      %v1056 = vpop.permute.xlu0 %1055
      %1057 = vrot.lane.b32.xlu0 %v1019, 15
      %v1058 = vpop.permute.xlu0 %1057
      %1059 = vrot.lane.b32.xlu0 %v1017, 15
      %v1060 = vpop.permute.xlu0 %1059
      %1061 = vrot.lane.b32.xlu0 %v1021, 15
      %v1062 = vpop.permute.xlu0 %1061
      %v1063 = vsel %vm532, %v1056, %v1060
      %v1064 = vsel %vm532, %v1058, %v1062
      %v1065 = vsel %vm532, %v1060, %v1056
      %v1066 = vsel %vm532, %v1062, %v1058
      %v1067 = vmul.f32 %v1065, %v539
      %v1068 = vmul.f32 %v1063, %v543
      %v1069 = vmul.f32 %v1066, %v539
      %v1070 = vmul.f32 %v1064, %v543
      %1071 = vrot.lane.b32.xlu0 %v1015, 1
      %v1072 = vpop.permute.xlu0 %1071
      %1073 = vrot.lane.b32.xlu0 %v1019, 1
      %v1074 = vpop.permute.xlu0 %1073
      %1075 = vrot.lane.b32.xlu0 %v1017, 1
      %v1076 = vpop.permute.xlu0 %1075
      %1077 = vrot.lane.b32.xlu0 %v1021, 1
      %v1078 = vpop.permute.xlu0 %1077
      %v1079 = vsel %vm552, %v1072, %v1076
      %v1080 = vsel %vm552, %v1074, %v1078
      %v1081 = vsel %vm552, %v1076, %v1072
      %v1082 = vsel %vm552, %v1078, %v1074
      %v1083 = vmul.f32 %v1081, %v559
      %v1084 = vmul.f32 %v1079, %v563
      %v1085 = vmul.f32 %v1082, %v559
      %v1086 = vmul.f32 %v1080, %v563
      %1087 = vrot.lane.b32.xlu0 %v1015, 127
      %v1088 = vpop.permute.xlu0 %1087
      %1089 = vrot.lane.b32.xlu0 %v1019, 127
      %v1090 = vpop.permute.xlu0 %1089
      %1091 = vrot.lane.b32.xlu0 %v1017, 127
      %v1092 = vpop.permute.xlu0 %1091
      %1093 = vrot.lane.b32.xlu0 %v1021, 127
      %v1094 = vpop.permute.xlu0 %1093
      %v1095 = vsel %vm572, %v1088, %v1092
      %v1096 = vsel %vm572, %v1090, %v1094
      %v1097 = vsel %vm572, %v1092, %v1088
      %v1098 = vsel %vm572, %v1094, %v1090
      %v1099 = vmul.f32 %v1095, %v579
      %v1100 = vmul.f32 %v1097, %v583
      %v1101 = vmul.f32 %v1096, %v579
      %v1102 = vmul.f32 %v1098, %v583
      %1103 = vrot.lane.b32.xlu0 %v1015, 113
      %v1104 = vpop.permute.xlu0 %1103
      %1105 = vrot.lane.b32.xlu0 %v1019, 113
      %v1106 = vpop.permute.xlu0 %1105
      %1107 = vrot.lane.b32.xlu0 %v1017, 113
      %v1108 = vpop.permute.xlu0 %1107
      %1109 = vrot.lane.b32.xlu0 %v1021, 113
      %v1110 = vpop.permute.xlu0 %1109
      %v1111 = vsel %vm592, %v1104, %v1108
      %v1112 = vsel %vm592, %v1106, %v1110
      %v1113 = vsel %vm592, %v1108, %v1104
      %v1114 = vsel %vm592, %v1110, %v1106
      %v1115 = vmul.f32 %v1111, %v599
      %v1116 = vmul.f32 %v1113, %v603
      %v1117 = vmul.f32 %v1112, %v599
      %v1118 = vmul.f32 %v1114, %v603
      %1119 = vrot.lane.b32.xlu0 %v1015, 112
      %v1120 = vpop.permute.xlu0 %1119
      %1121 = vrot.lane.b32.xlu0 %v1019, 112
      %v1122 = vpop.permute.xlu0 %1121
      %1123 = vrot.lane.b32.xlu0 %v1017, 112
      %v1124 = vpop.permute.xlu0 %1123
      %1125 = vrot.lane.b32.xlu0 %v1021, 112
      %v1126 = vpop.permute.xlu0 %1125
      %v1127 = vsel %vm612, %v1120, %v1124
      %v1128 = vsel %vm612, %v1122, %v1126
      %v1129 = vsel %vm612, %v1124, %v1120
      %v1130 = vsel %vm612, %v1126, %v1122
      %v1131 = vmul.f32 %v1127, %v619
      %v1132 = vmul.f32 %v1129, %v623
      %v1133 = vmul.f32 %v1128, %v619
      %v1134 = vmul.f32 %v1130, %v623
      %1135 = vrot.lane.b32.xlu0 %v1015, 111
      %v1136 = vpop.permute.xlu0 %1135
      %1137 = vrot.lane.b32.xlu0 %v1019, 111
      %v1138 = vpop.permute.xlu0 %1137
      %1139 = vrot.lane.b32.xlu0 %v1017, 111
      %v1140 = vpop.permute.xlu0 %1139
      %1141 = vrot.lane.b32.xlu0 %v1021, 111
      %v1142 = vpop.permute.xlu0 %1141
      %v1143 = vsel %vm632, %v1136, %v1140
      %v1144 = vsel %vm632, %v1138, %v1142
      %v1145 = vsel %vm632, %v1140, %v1136
      %v1146 = vsel %vm632, %v1142, %v1138
      %v1147 = vmul.f32 %v1143, %v639
      %v1148 = vmul.f32 %v1145, %v643
      %v1149 = vmul.f32 %v1144, %v639
      %v1150 = vmul.f32 %v1146, %v643
      %v1151 = vpack.c.bf16 %v1037, %v1035
      %v1152 = vpack.c.bf16 %v1038, %v1036
      %v1153 = vpack.c.bf16 %v1053, %v1051
      %v1154 = vpack.c.bf16 %v1054, %v1052
      %v1155 = vpack.c.bf16 %v1069, %v1067
      %v1156 = vpack.c.bf16 %v1070, %v1068
      %v1157 = vpack.c.bf16 %v1085, %v1083
      %v1158 = vpack.c.bf16 %v1086, %v1084
      %v1159 = vpack.c.bf16 %v1019, %v1015
      %v1160 = vpack.c.bf16 %v1021, %v1017
      %v1161 = vpack.c.bf16 %v1101, %v1099
      %v1162 = vpack.c.bf16 %v1102, %v1100
      %v1163 = vpack.c.bf16 %v1117, %v1115
      %v1164 = vpack.c.bf16 %v1118, %v1116
      %v1165 = vpack.c.bf16 %v1133, %v1131
      %v1166 = vpack.c.bf16 %v1134, %v1132
      %v1167 = vpack.c.bf16 %v1149, %v1147
      %v1168 = vpack.c.bf16 %v1150, %v1148
      %v1169 = vld [vmem:[%s8] sm:$0xff]
      %v1170 = vld [vmem:[%s8 + $0x8] sm:$0xff]
      %v1171 = vld [vmem:[%s9] sm:$0xff]
      %v1172 = vld [vmem:[%s9 + $0x8] sm:$0xff]
      %1174 = vset.pattern.permute.xlu0 0
      %1175 = vperm.xlu0 %1174, %v1171
      %v1176 = vpop.permute.xlu0 %1175
      %1179 = vset.pattern.permute.xlu0 0
      %1180 = vperm.xlu0 %1179, %v1172
      %v1181 = vpop.permute.xlu0 %1180
      %v1185 = vunpack.c.l.b16 %v1169
      %v1186 = vunpack.c.h.b16 %v1169
      %v1187 = vunpack.c.l.b16 %v1170
      %v1188 = vunpack.c.h.b16 %v1170
      %v1189 = vpack.c.b16 %v1187, %v1185
      %v1190 = vpack.c.b16 %v1188, %v1186
      %v1193 = vsel %vm904, %v1190, 0
      %1195 = vmatprep.subr.bf16.mxu0 %v1152
      %1196 = vmatpush1.bf16.msra.mxu0 %v1151
      %1197 = vmatprep.subr.bf16.mxu0 %v1154
      %1198 = vmatpush1.bf16.msra.mxu0 %v1153
      %1199 = vmatprep.subr.bf16.mxu0 %v1156
      %1200 = vmatpush1.bf16.msra.mxu0 %v1155
      %1201 = vmatprep.subr.bf16.mxu0 %v1158
      %1202 = vmatpush1.bf16.msra.mxu0 %v1157
      %1203 = vmatprep.subr.bf16.mxu0 %v1160
      %1204 = vmatpush1.bf16.msra.mxu0 %v1159
      %1205 = vmatprep.subr.bf16.mxu0 %v1162
      %1206 = vmatpush1.bf16.msra.mxu0 %v1161
      %1207 = vmatprep.subr.bf16.mxu0 %v1164
      %1208 = vmatpush1.bf16.msra.mxu0 %v1163
      %1209 = vmatprep.subr.bf16.mxu0 %v1166
      %1210 = vmatpush1.bf16.msra.mxu0 %v1165
      %1211 = vmatprep.subr.bf16.mxu0 %v1168
      %1212 = vmatpush1.bf16.msra.mxu0 %v1167
      %1213 = vmatprep.subr.bf16.mxu0 0
      %1214 = vmatpush1.bf16.msra.mxu0 0
      %1215 = vmatprep.subr.bf16.mxu0 0
      %1216 = vmatpush1.bf16.msra.mxu0 0
      %1217 = vmatprep.subr.bf16.mxu0 0
      %1218 = vmatpush1.bf16.msra.mxu0 0
      %1219 = vmatprep.subr.bf16.mxu0 0
      %1220 = vmatpush1.bf16.msra.mxu0 0
      %1221 = vmatprep.subr.bf16.mxu0 0
      %1222 = vmatpush1.bf16.msra.mxu0 0
      %1223 = vmatprep.subr.bf16.mxu0 0
      %1224 = vmatpush1.bf16.msra.mxu0 0
      %1225 = vmatprep.subr.bf16.mxu0 0
      %1226 = vmatpush1.bf16.msra.mxu0 0
      %1227 = vmatprep.mubr.bf16.mxu0 %v1193
      %1228 = vmatmul.mubr.bf16.gmra.mrb[0].mxu0 %v1189
      %v1229 = vpop.f32.mrb[0].mxu0
      %v1230 = vadd.f32 %v1176, %v1229
      %v1231 = vpop.f32.mrb[0].mxu0
      %v1232 = vadd.f32 %v1176, %v1231
      %v1233 = vpop.f32.mrb[0].mxu0
      %v1234 = vadd.f32 %v1181, %v1233
      %v1235 = vpop.f32.mrb[0].mxu0
      %v1236 = vadd.f32 %v1181, %v1235
      %1237 = vdwg.mxu0
      %v1238 = vmax.f32 %v1230, 0.0
      %v1239 = vmax.f32 %v1232, 0.0
      %v1240 = vmax.f32 %v1234, 0.0
      %v1241 = vmax.f32 %v1236, 0.0
      %1242 = vrot.lane.b32.xlu0 %v1238, 17
      %v1243 = vpop.permute.xlu0 %1242
      %1244 = vrot.lane.b32.xlu0 %v1240, 17
      %v1245 = vpop.permute.xlu0 %1244
      %1246 = vrot.lane.b32.xlu0 %v1239, 17
      %v1247 = vpop.permute.xlu0 %1246
      %1248 = vrot.lane.b32.xlu0 %v1241, 17
      %v1249 = vpop.permute.xlu0 %1248
      %v1250 = vsel %vm492, %v1243, %v1247
      %v1251 = vsel %vm492, %v1245, %v1249
      %v1252 = vsel %vm492, %v1247, %v1243
      %v1253 = vsel %vm492, %v1249, %v1245
      %v1254 = vmul.f32 %v1252, %v499
      %v1255 = vmul.f32 %v1250, %v503
      %v1256 = vmul.f32 %v1253, %v499
      %v1257 = vmul.f32 %v1251, %v503
      %1258 = vrot.lane.b32.xlu0 %v1238, 16
      %v1259 = vpop.permute.xlu0 %1258
      %1260 = vrot.lane.b32.xlu0 %v1240, 16
      %v1261 = vpop.permute.xlu0 %1260
      %1262 = vrot.lane.b32.xlu0 %v1239, 16
      %v1263 = vpop.permute.xlu0 %1262
      %1264 = vrot.lane.b32.xlu0 %v1241, 16
      %v1265 = vpop.permute.xlu0 %1264
      %v1266 = vsel %vm512, %v1259, %v1263
      %v1267 = vsel %vm512, %v1261, %v1265
      %v1268 = vsel %vm512, %v1263, %v1259
      %v1269 = vsel %vm512, %v1265, %v1261
      %v1270 = vmul.f32 %v1268, %v519
      %v1271 = vmul.f32 %v1266, %v523
      %v1272 = vmul.f32 %v1269, %v519
      %v1273 = vmul.f32 %v1267, %v523
      %1274 = vrot.lane.b32.xlu0 %v1238, 15
      %v1275 = vpop.permute.xlu0 %1274
      %1276 = vrot.lane.b32.xlu0 %v1240, 15
      %v1277 = vpop.permute.xlu0 %1276
      %1278 = vrot.lane.b32.xlu0 %v1239, 15
      %v1279 = vpop.permute.xlu0 %1278
      %1280 = vrot.lane.b32.xlu0 %v1241, 15
      %v1281 = vpop.permute.xlu0 %1280
      %v1282 = vsel %vm532, %v1275, %v1279
      %v1283 = vsel %vm532, %v1277, %v1281
      %v1284 = vsel %vm532, %v1279, %v1275
      %v1285 = vsel %vm532, %v1281, %v1277
      %v1286 = vmul.f32 %v1284, %v539
      %v1287 = vmul.f32 %v1282, %v543
      %v1288 = vmul.f32 %v1285, %v539
      %v1289 = vmul.f32 %v1283, %v543
      %1290 = vrot.lane.b32.xlu0 %v1238, 1
      %v1291 = vpop.permute.xlu0 %1290
      %1292 = vrot.lane.b32.xlu0 %v1240, 1
      %v1293 = vpop.permute.xlu0 %1292
      %1294 = vrot.lane.b32.xlu0 %v1239, 1
      %v1295 = vpop.permute.xlu0 %1294
      %1296 = vrot.lane.b32.xlu0 %v1241, 1
      %v1297 = vpop.permute.xlu0 %1296
      %v1298 = vsel %vm552, %v1291, %v1295
      %v1299 = vsel %vm552, %v1293, %v1297
      %v1300 = vsel %vm552, %v1295, %v1291
      %v1301 = vsel %vm552, %v1297, %v1293
      %v1302 = vmul.f32 %v1300, %v559
      %v1303 = vmul.f32 %v1298, %v563
      %v1304 = vmul.f32 %v1301, %v559
      %v1305 = vmul.f32 %v1299, %v563
      %1306 = vrot.lane.b32.xlu0 %v1238, 127
      %v1307 = vpop.permute.xlu0 %1306
      %1308 = vrot.lane.b32.xlu0 %v1240, 127
      %v1309 = vpop.permute.xlu0 %1308
      %1310 = vrot.lane.b32.xlu0 %v1239, 127
      %v1311 = vpop.permute.xlu0 %1310
      %1312 = vrot.lane.b32.xlu0 %v1241, 127
      %v1313 = vpop.permute.xlu0 %1312
      %v1314 = vsel %vm572, %v1307, %v1311
      %v1315 = vsel %vm572, %v1309, %v1313
      %v1316 = vsel %vm572, %v1311, %v1307
      %v1317 = vsel %vm572, %v1313, %v1309
      %v1318 = vmul.f32 %v1314, %v579
      %v1319 = vmul.f32 %v1316, %v583
      %v1320 = vmul.f32 %v1315, %v579
      %v1321 = vmul.f32 %v1317, %v583
      %1322 = vrot.lane.b32.xlu0 %v1238, 113
      %v1323 = vpop.permute.xlu0 %1322
      %1324 = vrot.lane.b32.xlu0 %v1240, 113
      %v1325 = vpop.permute.xlu0 %1324
      %1326 = vrot.lane.b32.xlu0 %v1239, 113
      %v1327 = vpop.permute.xlu0 %1326
      %1328 = vrot.lane.b32.xlu0 %v1241, 113
      %v1329 = vpop.permute.xlu0 %1328
      %v1330 = vsel %vm592, %v1323, %v1327
      %v1331 = vsel %vm592, %v1325, %v1329
      %v1332 = vsel %vm592, %v1327, %v1323
      %v1333 = vsel %vm592, %v1329, %v1325
      %v1334 = vmul.f32 %v1330, %v599
      %v1335 = vmul.f32 %v1332, %v603
      %v1336 = vmul.f32 %v1331, %v599
      %v1337 = vmul.f32 %v1333, %v603
      %1338 = vrot.lane.b32.xlu0 %v1238, 112
      %v1339 = vpop.permute.xlu0 %1338
      %1340 = vrot.lane.b32.xlu0 %v1240, 112
      %v1341 = vpop.permute.xlu0 %1340
      %1342 = vrot.lane.b32.xlu0 %v1239, 112
      %v1343 = vpop.permute.xlu0 %1342
      %1344 = vrot.lane.b32.xlu0 %v1241, 112
      %v1345 = vpop.permute.xlu0 %1344
      %v1346 = vsel %vm612, %v1339, %v1343
      %v1347 = vsel %vm612, %v1341, %v1345
      %v1348 = vsel %vm612, %v1343, %v1339
      %v1349 = vsel %vm612, %v1345, %v1341
      %v1350 = vmul.f32 %v1346, %v619
      %v1351 = vmul.f32 %v1348, %v623
      %v1352 = vmul.f32 %v1347, %v619
      %v1353 = vmul.f32 %v1349, %v623
      %1354 = vrot.lane.b32.xlu0 %v1238, 111
      %v1355 = vpop.permute.xlu0 %1354
      %1356 = vrot.lane.b32.xlu0 %v1240, 111
      %v1357 = vpop.permute.xlu0 %1356
      %1358 = vrot.lane.b32.xlu0 %v1239, 111
      %v1359 = vpop.permute.xlu0 %1358
      %1360 = vrot.lane.b32.xlu0 %v1241, 111
      %v1361 = vpop.permute.xlu0 %1360
      %v1362 = vsel %vm632, %v1355, %v1359
      %v1363 = vsel %vm632, %v1357, %v1361
      %v1364 = vsel %vm632, %v1359, %v1355
      %v1365 = vsel %vm632, %v1361, %v1357
      %v1366 = vmul.f32 %v1362, %v639
      %v1367 = vmul.f32 %v1364, %v643
      %v1368 = vmul.f32 %v1363, %v639
      %v1369 = vmul.f32 %v1365, %v643
      %v1370 = vpack.c.bf16 %v1256, %v1254
      %v1371 = vpack.c.bf16 %v1257, %v1255
      %v1372 = vpack.c.bf16 %v1272, %v1270
      %v1373 = vpack.c.bf16 %v1273, %v1271
      %v1374 = vpack.c.bf16 %v1288, %v1286
      %v1375 = vpack.c.bf16 %v1289, %v1287
      %v1376 = vpack.c.bf16 %v1304, %v1302
      %v1377 = vpack.c.bf16 %v1305, %v1303
      %v1378 = vpack.c.bf16 %v1240, %v1238
      %v1379 = vpack.c.bf16 %v1241, %v1239
      %v1380 = vpack.c.bf16 %v1320, %v1318
      %v1381 = vpack.c.bf16 %v1321, %v1319
      %v1382 = vpack.c.bf16 %v1336, %v1334
      %v1383 = vpack.c.bf16 %v1337, %v1335
      %v1384 = vpack.c.bf16 %v1352, %v1350
      %v1385 = vpack.c.bf16 %v1353, %v1351
      %v1386 = vpack.c.bf16 %v1368, %v1366
      %v1387 = vpack.c.bf16 %v1369, %v1367
      %v1388 = vld [vmem:[%s10] sm:$0xff]
      %v1389 = vld [vmem:[%s10 + $0x8] sm:$0xff]
      %v1390 = vld [vmem:[%s11] sm:$0xff]
      %v1391 = vld [vmem:[%s11 + $0x8] sm:$0xff]
      %1393 = vset.pattern.permute.xlu0 0
      %1394 = vperm.xlu0 %1393, %v1390
      %v1395 = vpop.permute.xlu0 %1394
      %1398 = vset.pattern.permute.xlu0 0
      %1399 = vperm.xlu0 %1398, %v1391
      %v1400 = vpop.permute.xlu0 %1399
      %v1404 = vunpack.c.l.b16 %v1388
      %v1405 = vunpack.c.h.b16 %v1388
      %v1406 = vunpack.c.l.b16 %v1389
      %v1407 = vunpack.c.h.b16 %v1389
      %v1408 = vpack.c.b16 %v1406, %v1404
      %v1409 = vpack.c.b16 %v1407, %v1405
      %v1412 = vsel %vm904, %v1409, 0
      %1414 = vmatprep.subr.bf16.mxu0 %v1371
      %1415 = vmatpush1.bf16.msra.mxu0 %v1370
      %1416 = vmatprep.subr.bf16.mxu0 %v1373
      %1417 = vmatpush1.bf16.msra.mxu0 %v1372
      %1418 = vmatprep.subr.bf16.mxu0 %v1375
      %1419 = vmatpush1.bf16.msra.mxu0 %v1374
      %1420 = vmatprep.subr.bf16.mxu0 %v1377
      %1421 = vmatpush1.bf16.msra.mxu0 %v1376
      %1422 = vmatprep.subr.bf16.mxu0 %v1379
      %1423 = vmatpush1.bf16.msra.mxu0 %v1378
      %1424 = vmatprep.subr.bf16.mxu0 %v1381
      %1425 = vmatpush1.bf16.msra.mxu0 %v1380
      %1426 = vmatprep.subr.bf16.mxu0 %v1383
      %1427 = vmatpush1.bf16.msra.mxu0 %v1382
      %1428 = vmatprep.subr.bf16.mxu0 %v1385
      %1429 = vmatpush1.bf16.msra.mxu0 %v1384
      %1430 = vmatprep.subr.bf16.mxu0 %v1387
      %1431 = vmatpush1.bf16.msra.mxu0 %v1386
      %1432 = vmatprep.subr.bf16.mxu0 0
      %1433 = vmatpush1.bf16.msra.mxu0 0
      %1434 = vmatprep.subr.bf16.mxu0 0
      %1435 = vmatpush1.bf16.msra.mxu0 0
      %1436 = vmatprep.subr.bf16.mxu0 0
      %1437 = vmatpush1.bf16.msra.mxu0 0
      %1438 = vmatprep.subr.bf16.mxu0 0
      %1439 = vmatpush1.bf16.msra.mxu0 0
      %1440 = vmatprep.subr.bf16.mxu0 0
      %1441 = vmatpush1.bf16.msra.mxu0 0
      %1442 = vmatprep.subr.bf16.mxu0 0
      %1443 = vmatpush1.bf16.msra.mxu0 0
      %1444 = vmatprep.subr.bf16.mxu0 0
      %1445 = vmatpush1.bf16.msra.mxu0 0
      %1446 = vmatprep.mubr.bf16.mxu0 %v1412
      %1447 = vmatmul.mubr.bf16.gmra.mrb[0].mxu0 %v1408
      %v1448 = vpop.f32.mrb[0].mxu0
      %v1449 = vadd.f32 %v1395, %v1448
      %v1450 = vpop.f32.mrb[0].mxu0
      %v1451 = vadd.f32 %v1395, %v1450
      %v1452 = vpop.f32.mrb[0].mxu0
      %v1453 = vadd.f32 %v1400, %v1452
      %v1454 = vpop.f32.mrb[0].mxu0
      %v1455 = vadd.f32 %v1400, %v1454
      %1456 = vdwg.mxu0
      %v1457 = vmax.f32 %v1449, 0.0
      %v1458 = vmax.f32 %v1451, 0.0
      %v1459 = vmax.f32 %v1453, 0.0
      %v1460 = vmax.f32 %v1455, 0.0
      %v1461 = vpack.c.bf16 %v1459, %v1457
      %v1462 = vpack.c.bf16 %v1460, %v1458
      %v1463 = vld [vmem:[%s12] sm:$0xf]
      %v1464 = vld [vmem:[%s12 + $0x4] sm:$0xf]
      %v1465 = vld [vmem:[%s13] sm:$0xff]
      %v1466 = vld [vmem:[%s13 + $0x8] sm:$0xff]
      %1468 = vset.pattern.permute.xlu0 0
      %1469 = vperm.xlu0 %1468, %v1465
      %v1470 = vpop.permute.xlu0 %1469
      %1473 = vset.pattern.permute.xlu0 0
      %1474 = vperm.xlu0 %1473, %v1466
      %v1475 = vpop.permute.xlu0 %1474
      %v1479 = vunpack.c.l.b16 %v1463
      %v1480 = vunpack.c.l.b16 %v1464
      %v1481 = vpack.c.b16 %v1480, %v1479
      %vm1482 = vcmask 392192
      %v1484 = vsel %vm1482, %v1481, 0
      %1486 = vmatprep.subr.bf16.mxu0 %v1160
      %1487 = vmatpush1.bf16.msra.mxu0 %v1159
      %1488 = vmatprep.subr.bf16.mxu0 %v1379
      %1489 = vmatpush1.bf16.msra.mxu0 %v1378
      %1490 = vmatprep.subr.bf16.mxu0 %v1462
      %1491 = vmatpush1.bf16.msra.mxu0 %v1461
      %1492 = vmatprep.subr.bf16.mxu0 0
      %1493 = vmatpush1.bf16.msra.mxu0 0
      %1494 = vmatprep.subr.bf16.mxu0 0
      %1495 = vmatpush1.bf16.msra.mxu0 0
      %1496 = vmatprep.subr.bf16.mxu0 0
      %1497 = vmatpush1.bf16.msra.mxu0 0
      %1498 = vmatprep.subr.bf16.mxu0 0
      %1499 = vmatpush1.bf16.msra.mxu0 0
      %1500 = vmatprep.subr.bf16.mxu0 0
      %1501 = vmatpush1.bf16.msra.mxu0 0
      %1502 = vmatprep.subr.bf16.mxu0 0
      %1503 = vmatpush1.bf16.msra.mxu0 0
      %1504 = vmatprep.subr.bf16.mxu0 0
      %1505 = vmatpush1.bf16.msra.mxu0 0
      %1506 = vmatprep.subr.bf16.mxu0 0
      %1507 = vmatpush1.bf16.msra.mxu0 0
      %1508 = vmatprep.subr.bf16.mxu0 0
      %1509 = vmatpush1.bf16.msra.mxu0 0
      %1510 = vmatprep.subr.bf16.mxu0 0
      %1511 = vmatpush1.bf16.msra.mxu0 0
      %1512 = vmatprep.subr.bf16.mxu0 0
      %1513 = vmatpush1.bf16.msra.mxu0 0
      %1514 = vmatprep.subr.bf16.mxu0 0
      %1515 = vmatpush1.bf16.msra.mxu0 0
      %1516 = vmatprep.subr.bf16.mxu0 0
      %1517 = vmatpush1.bf16.msra.mxu0 0
      %1518 = vmatprep.mubr.bf16.mxu0 0
      %1519 = vmatmul.mubr.bf16.gmra.mrb[0].mxu0 %v1484
      %v1520 = vpop.f32.mrb[0].mxu0
      %v1521 = vadd.f32 %v1470, %v1520
      %v1522 = vpop.f32.mrb[0].mxu0
      %v1523 = vadd.f32 %v1470, %v1522
      %v1524 = vpop.f32.mrb[0].mxu0
      %v1525 = vadd.f32 %v1475, %v1524
      %v1526 = vpop.f32.mrb[0].mxu0
      %v1527 = vadd.f32 %v1475, %v1526
      %1528 = vdwg.mxu0
      %1529 = vst [vmem:[%s467] sm:$0xff] %v1521
      %1530 = vst [vmem:[%s467 + $0x8] sm:$0xff] %v1523
      %1531 = vst [vmem:[%s467 + $0x10] sm:$0xff] %v1525
      %1532 = vst [vmem:[%s467 + $0x18] sm:$0xff] %v1527
      %p1533 = scmp.lt.s32.totalorder %s25, 1
      %s1534 = scalar_select %p1533, %s25, 1
      %s1535 = smul.addr %s1534, 4
      %s1536 = smul.addr %s1535, 8
      %s1537 = scalar_lea.vmem %s14, %s1536
      // Predicated region
      $region77: #{_lambda_.1} parent=75 // pred_check
        %p1538 = pneg %p342
      $region78: #{_lambda_.1} parent=75 // pred_check_branch
        %1540 = sbr.rel (%p1538) target = $region80
      $region79: #{_lambda_.1} parent=75 // pred_region
        _
      $region80: #{_lambda_.1} parent=75 // pred_fallthru
        _
    $region76: #{_lambda_.1} parent=5 // pred_fallthru
      _
    %p1541 = scmp.le.s32.totalorder 2, %s20
    // Predicated region
    $region81: #{_lambda_.1} parent=5 // pred_check
      %p1542 = pneg %p1541
    $region82: #{_lambda_.1} parent=5 // pred_check_branch
      %1544 = sbr.rel (%p1542) target = $region84
    $region83: #{_lambda_.1} parent=5 // pred_region
      %s1545 = ssub.s32 %s20, 2
      // Predicated region
      $region85: #{_lambda_.1} parent=83 // pred_check
        %p1546 = pneg %p348
      $region86: #{_lambda_.1} parent=83 // pred_check_branch
        %1548 = sbr.rel (%p1546) target = $region88
      $region87: #{_lambda_.1} parent=83 // pred_region
        %p1549 = scmp.lt.s32.totalorder %s26, 1
        %s1550 = scalar_select %p1549, %s26, 1
        %s1551 = smul.addr %s1550, 4
        %s1552 = smul.addr %s1551, 8
        %s1553 = scalar_lea.vmem %s14, %s1552
      $region88: #{_lambda_.1} parent=83 // pred_fallthru
        _
    $region84: #{_lambda_.1} parent=5 // pred_fallthru
      _
  $region6: #{_lambda_.1} parent=0 // loop_footer
    %s24 = sadd.s32 1, %s20
  $region7: #{_lambda_.1} parent=0 // loop_footer_branch
    %19 = sbr.rel target = $region3
  $region8: #{_lambda_.1} parent=0 // loop_exit
    _

</llo_original>
